<compile_context>
chip_gen: v7x
topology: tpu7x:2x2x1
jax: 0.10.0
libtpu: 0.0.40
codegen_flags: <defaults>
</compile_context>

<pallas_src>
import functools
import math

import numpy as np
import jax
import jax.numpy as jnp
from jax.experimental import pallas as pl
from jax.experimental.pallas import tpu as pltpu

# Irreps spec: list of (multiplicity, l).  Equivalent to e3nn "8x0e + 4x1o + 2x2e".
IRREPS = ((8, 0), (4, 1), (2, 2))


def _normalize2mom(act_np):
    """e3nn normalize2mom constant 1/sqrt(E_{z~N(0,1)}[act(z)^2]) via Gauss-Hermite.
    (Deterministic; matches e3nn's sampled estimate up to its own sampling noise.)"""
    nodes, weights = np.polynomial.hermite_e.hermegauss(201)
    w = weights / np.sqrt(2.0 * np.pi)
    return float(1.0 / np.sqrt(np.sum(w * act_np(nodes) ** 2)))


def _sigmoid_np(z):
    return 1.0 / (1.0 + np.exp(-z))


def _silu_np(z):
    return z * _sigmoid_np(z)


C_SCALAR = _normalize2mom(_silu_np)    # act_scalars = SiLU
C_GATE = _normalize2mom(_sigmoid_np)   # act_gates   = sigmoid


def _build_pattern(irreps):
    """Per-column segment id (-1 for scalars) and w3j weight of the DTOT-wide pattern."""
    seg, w3j = [], []
    sid = 0
    for mul, l in irreps:
        dim = 2 * l + 1
        for _ in range(mul):
            if l == 0:
                seg.append(-1)
                w3j.append(0.0)
            else:
                seg.extend([sid] * dim)
                w3j.extend([1.0 / math.sqrt(dim)] * dim)   # wigner_3j(l,l,0) diag
                sid += 1
    return np.asarray(seg, np.int64), np.asarray(w3j, np.float64)


_SEG, _W3J = _build_pattern(IRREPS)
DTOT = int(_SEG.shape[0])                         # 30
KMAX = max([2 * l for _, l in IRREPS] + [0])      # largest intra-channel lane offset (4)
PACK = math.lcm(DTOT, 128) // DTOT                # logical rows per physical row (64)
LANE = DTOT * PACK                                # packed lane width (1920 = 15*128)


def _build_consts():
    """Constant table, shape (2*KMAX+3, LANE) f32:
         rows 0..2K   : W_k, weight applied to source lane (col + k), k = row - KMAX
                        (zero wherever col+k leaves the channel, so circular roll
                         wrap across logical-row boundaries is automatically masked)
         row  2K+1    : 1.0 on scalar (l==0) lanes, else 0.0
         row  2K+2    : post-sigmoid coefficient (c_scalar on scalar lanes, c_gate else)
    """
    nk = 2 * KMAX + 1
    consts = np.zeros((nk + 2, DTOT), np.float64)
    for c in range(DTOT):
        if _SEG[c] < 0:
            consts[nk, c] = 1.0
            consts[nk + 1, c] = C_SCALAR
            continue
        consts[nk + 1, c] = C_GATE
        for k in range(-KMAX, KMAX + 1):
            q = c + k
            if 0 <= q < DTOT and _SEG[q] == _SEG[c]:
                consts[KMAX + k, c] = _W3J[c]
    return np.tile(consts, (1, PACK)).astype(np.float32)


_CONSTS_NP = _build_consts()


def _self_gate_kernel(consts_ref, x_ref, o_ref, *, kmax, lane):
    x = x_ref[...]                                   # (tbr, LANE) f32, lane-dense
    sq = x * x
    nk = 2 * kmax + 1

    # Per-channel self dot product <x,x>/sqrt(2l+1), broadcast back onto every lane
    # of its channel, as a weighted sum of lane-rolled squares.  Rolls land on the
    # XLU, multiply-adds on the VPU; the (slow-in-f32) MXU is never used.
    dot = consts_ref[kmax:kmax + 1, :] * sq                       # k = 0 tap
    for k in range(1, kmax + 1):
        # source lane col + k  (roll(a, lane-k)[p] == a[(p+k) % lane])
        dot = dot + consts_ref[kmax + k:kmax + k + 1, :] * pltpu.roll(sq, lane - k, axis=1)
        # source lane col - k  (roll(a, k)[p]       == a[(p-k) % lane])
        dot = dot + consts_ref[kmax - k:kmax - k + 1, :] * pltpu.roll(sq, k, axis=1)

    is_scalar = consts_ref[nk:nk + 1, :] > 0.5
    coef = consts_ref[nk + 1:nk + 2, :]              # c_scalar / c_gate per lane
    sig_in = jnp.where(is_scalar, x, dot)            # one sigmoid serves SiLU + gate
    o_ref[...] = (x * (coef * jax.nn.sigmoid(sig_in))).astype(o_ref.dtype)


def _self_gate_impl(x, *, tbr=256):
    """x: (B, DTOT) float32.  Returns same shape/dtype."""
    b, d = x.shape
    assert d == DTOT
    rem = b % PACK
    if rem:
        # Only a batch that is not a multiple of PACK (=64) pays this pad copy.
        # TODO(synk): callers in a hot loop should round the batch to a multiple of 64.
        x = jnp.pad(x, ((0, PACK - rem), (0, 0)))
    bp = x.shape[0]
    r = bp // PACK
    xs = x.reshape(r, LANE)                          # free view of the same HBM buffer

    if r < 8:
        tbr_eff = r                                  # full-extent block (always legal)
    else:
        tbr_eff = max(8, min(int(tbr), (r // 8) * 8))
    grid = (pl.cdiv(r, tbr_eff),)                    # ragged last block masked by Pallas

    n_elem = r * LANE
    cost = pl.CostEstimate(
        flops=int(n_elem * (4 * KMAX + 5)),
        transcendentals=int(n_elem),
        bytes_accessed=int(2 * n_elem * 4 + _CONSTS_NP.size * 4),
    )

    out = pl.pallas_call(
        functools.partial(_self_gate_kernel, kmax=KMAX, lane=LANE),
        out_shape=jax.ShapeDtypeStruct((r, LANE), x.dtype),
        grid=grid,
        in_specs=[
            # tiny constant table: whole array resident in VMEM, no per-step DMA
            pl.BlockSpec(memory_space=pltpu.MemorySpace.VMEM),
            pl.BlockSpec((tbr_eff, LANE), lambda i: (i, 0)),
        ],
        out_specs=pl.BlockSpec((tbr_eff, LANE), lambda i: (i, 0)),
        compiler_params=pltpu.CompilerParams(
            dimension_semantics=("parallel",),        # batch axis: shard across v7x TCs
            vmem_limit_bytes=48 * 1024 * 1024,
        ),
        cost_estimate=cost,
    )(jnp.asarray(_CONSTS_NP), xs)

    out = out.reshape(bp, d)                          # free view back to (B, DTOT)
    return out[:b] if rem else out


# jit so the constant table is baked into the executable (no per-call H2D transfer).
self_gate = jax.jit(_self_gate_impl, static_argnames=("tbr",))


def _reference(x):
    """Pure-JAX reference of the forward pass (for correctness check)."""
    outs = []
    off = 0
    for mul, l in IRREPS:
        dim = 2 * l + 1
        blk = x[:, off:off + mul * dim]
        if l == 0:
            outs.append(C_SCALAR * jax.nn.silu(blk))
        else:
            b3 = blk.reshape(-1, mul, dim)
            gate = jnp.sum(b3 * b3, axis=-1) / np.sqrt(dim)
            g = C_GATE * jax.nn.sigmoid(gate)
            outs.append((b3 * g[:, :, None]).reshape(-1, mul * dim))
        off += mul * dim
    return jnp.concatenate(outs, axis=-1)


if __name__ == "__main__":
    key = jax.random.PRNGKey(0)
    k0, k1 = jax.random.split(key)

    B = 128                                            # multiple of PACK=64: no padding
    x = jax.random.normal(k0, (B, DTOT), dtype=jnp.float32)   # DTOT = 8 + 12 + 10 = 30
    out = jax.block_until_ready(self_gate(x))
    ref = jax.block_until_ready(_reference(x))
    assert out.shape == x.shape and out.dtype == x.dtype
    np.testing.assert_allclose(np.asarray(out), np.asarray(ref), rtol=1e-5, atol=1e-5)

    # ragged batch (exercises the one-off pad path)
    x2 = jax.random.normal(k1, (13, DTOT), dtype=jnp.float32)
    out2 = jax.block_until_ready(self_gate(x2))
    np.testing.assert_allclose(np.asarray(out2), np.asarray(_reference(x2)),
                               rtol=1e-5, atol=1e-5)

    print("KERNEL_OK")
</pallas_src>

<mosaic_0001>
module attributes {stable_mosaic.version = 11 : i64} {
  func.func @_self_gate_kernel(%arg0: i32, %arg1: memref<11x1920xf32, #tpu.memory_space<vmem>>, %arg2: memref<2x1920xf32, #tpu.memory_space<vmem>>, %arg3: memref<2x1920xf32, #tpu.memory_space<vmem>>) attributes {dimension_semantics = [#tpu.dimension_semantics<parallel>], iteration_bounds = array<i64: 1>, scalar_prefetch = 0 : i64, scratch_operands = 0 : i64, tpu.core_type = #tpu.core_type<tc>, window_params = [{pipeline_mode = #tpu.pipeline_mode<synchronous>, transform_indices = @transform_0, window_bounds = array<i64: 11, 1920>}, {transform_indices = @transform_1, window_bounds = array<i64: 2, 1920>}, {transform_indices = @transform_2, window_bounds = array<i64: 2, 1920>}]} {
    %c0 = arith.constant 0 : index
    %c0_0 = arith.constant 0 : index
    %0 = vector.load %arg2[%c0, %c0_0] : memref<2x1920xf32, #tpu.memory_space<vmem>>, vector<2x1920xf32>
    %1 = arith.mulf %0, %0 : vector<2x1920xf32>
    %c4 = arith.constant 4 : index
    %c0_1 = arith.constant 0 : index
    %2 = vector.load %arg1[%c4, %c0_1] : memref<11x1920xf32, #tpu.memory_space<vmem>>, vector<1x1920xf32>
    %3 = vector.broadcast %2 : vector<1x1920xf32> to vector<2x1920xf32>
    %4 = arith.mulf %3, %1 : vector<2x1920xf32>
    %c5 = arith.constant 5 : index
    %c0_2 = arith.constant 0 : index
    %5 = vector.load %arg1[%c5, %c0_2] : memref<11x1920xf32, #tpu.memory_space<vmem>>, vector<1x1920xf32>
    %c1919_i32 = arith.constant 1919 : i32
    %6 = tpu.dynamic_rotate %1 by %c1919_i32 dim 1 : vector<2x1920xf32>, i32 -> vector<2x1920xf32>
    %7 = vector.broadcast %5 : vector<1x1920xf32> to vector<2x1920xf32>
    %8 = arith.mulf %7, %6 : vector<2x1920xf32>
    %9 = arith.addf %4, %8 : vector<2x1920xf32>
    %c3 = arith.constant 3 : index
    %c0_3 = arith.constant 0 : index
    %10 = vector.load %arg1[%c3, %c0_3] : memref<11x1920xf32, #tpu.memory_space<vmem>>, vector<1x1920xf32>
    %c1_i32 = arith.constant 1 : i32
    %11 = tpu.dynamic_rotate %1 by %c1_i32 dim 1 : vector<2x1920xf32>, i32 -> vector<2x1920xf32>
    %12 = vector.broadcast %10 : vector<1x1920xf32> to vector<2x1920xf32>
    %13 = arith.mulf %12, %11 : vector<2x1920xf32>
    %14 = arith.addf %9, %13 : vector<2x1920xf32>
    %c6 = arith.constant 6 : index
    %c0_4 = arith.constant 0 : index
    %15 = vector.load %arg1[%c6, %c0_4] : memref<11x1920xf32, #tpu.memory_space<vmem>>, vector<1x1920xf32>
    %c1918_i32 = arith.constant 1918 : i32
    %16 = tpu.dynamic_rotate %1 by %c1918_i32 dim 1 : vector<2x1920xf32>, i32 -> vector<2x1920xf32>
    %17 = vector.broadcast %15 : vector<1x1920xf32> to vector<2x1920xf32>
    %18 = arith.mulf %17, %16 : vector<2x1920xf32>
    %19 = arith.addf %14, %18 : vector<2x1920xf32>
    %c2 = arith.constant 2 : index
    %c0_5 = arith.constant 0 : index
    %20 = vector.load %arg1[%c2, %c0_5] : memref<11x1920xf32, #tpu.memory_space<vmem>>, vector<1x1920xf32>
    %c2_i32 = arith.constant 2 : i32
    %21 = tpu.dynamic_rotate %1 by %c2_i32 dim 1 : vector<2x1920xf32>, i32 -> vector<2x1920xf32>
    %22 = vector.broadcast %20 : vector<1x1920xf32> to vector<2x1920xf32>
    %23 = arith.mulf %22, %21 : vector<2x1920xf32>
    %24 = arith.addf %19, %23 : vector<2x1920xf32>
    %c7 = arith.constant 7 : index
    %c0_6 = arith.constant 0 : index
    %25 = vector.load %arg1[%c7, %c0_6] : memref<11x1920xf32, #tpu.memory_space<vmem>>, vector<1x1920xf32>
    %c1917_i32 = arith.constant 1917 : i32
    %26 = tpu.dynamic_rotate %1 by %c1917_i32 dim 1 : vector<2x1920xf32>, i32 -> vector<2x1920xf32>
    %27 = vector.broadcast %25 : vector<1x1920xf32> to vector<2x1920xf32>
    %28 = arith.mulf %27, %26 : vector<2x1920xf32>
    %29 = arith.addf %24, %28 : vector<2x1920xf32>
    %c1 = arith.constant 1 : index
    %c0_7 = arith.constant 0 : index
    %30 = vector.load %arg1[%c1, %c0_7] : memref<11x1920xf32, #tpu.memory_space<vmem>>, vector<1x1920xf32>
    %c3_i32 = arith.constant 3 : i32
    %31 = tpu.dynamic_rotate %1 by %c3_i32 dim 1 : vector<2x1920xf32>, i32 -> vector<2x1920xf32>
    %32 = vector.broadcast %30 : vector<1x1920xf32> to vector<2x1920xf32>
    %33 = arith.mulf %32, %31 : vector<2x1920xf32>
    %34 = arith.addf %29, %33 : vector<2x1920xf32>
    %c8 = arith.constant 8 : index
    %c0_8 = arith.constant 0 : index
    %35 = vector.load %arg1[%c8, %c0_8] : memref<11x1920xf32, #tpu.memory_space<vmem>>, vector<1x1920xf32>
    %c1916_i32 = arith.constant 1916 : i32
    %36 = tpu.dynamic_rotate %1 by %c1916_i32 dim 1 : vector<2x1920xf32>, i32 -> vector<2x1920xf32>
    %37 = vector.broadcast %35 : vector<1x1920xf32> to vector<2x1920xf32>
    %38 = arith.mulf %37, %36 : vector<2x1920xf32>
    %39 = arith.addf %34, %38 : vector<2x1920xf32>
    %c0_9 = arith.constant 0 : index
    %c0_10 = arith.constant 0 : index
    %40 = vector.load %arg1[%c0_9, %c0_10] : memref<11x1920xf32, #tpu.memory_space<vmem>>, vector<1x1920xf32>
    %c4_i32 = arith.constant 4 : i32
    %41 = tpu.dynamic_rotate %1 by %c4_i32 dim 1 : vector<2x1920xf32>, i32 -> vector<2x1920xf32>
    %42 = vector.broadcast %40 : vector<1x1920xf32> to vector<2x1920xf32>
    %43 = arith.mulf %42, %41 : vector<2x1920xf32>
    %44 = arith.addf %39, %43 : vector<2x1920xf32>
    %c9 = arith.constant 9 : index
    %c0_11 = arith.constant 0 : index
    %45 = vector.load %arg1[%c9, %c0_11] : memref<11x1920xf32, #tpu.memory_space<vmem>>, vector<1x1920xf32>
    %cst = arith.constant 5.000000e-01 : f32
    %46 = vector.broadcast %cst : f32 to vector<1x1920xf32>
    %47 = arith.cmpf ogt, %45, %46 : vector<1x1920xf32>
    %c10 = arith.constant 10 : index
    %c0_12 = arith.constant 0 : index
    %48 = vector.load %arg1[%c10, %c0_12] : memref<11x1920xf32, #tpu.memory_space<vmem>>, vector<1x1920xf32>
    %49 = vector.shape_cast %47 : vector<1x1920xi1> to vector<1x1920xi1>
    %50 = vector.broadcast %49 : vector<1x1920xi1> to vector<2x1920xi1>
    %51 = arith.select %50, %0, %44 : vector<2x1920xi1>, vector<2x1920xf32>
    %52 = arith.negf %51 : vector<2x1920xf32>
    %53 = math.exp %52 : vector<2x1920xf32>
    %cst_13 = arith.constant 1.000000e+00 : f32
    %54 = vector.broadcast %cst_13 : f32 to vector<2x1920xf32>
    %55 = arith.addf %54, %53 : vector<2x1920xf32>
    %56 = arith.divf %54, %55 : vector<2x1920xf32>
    %57 = vector.broadcast %48 : vector<1x1920xf32> to vector<2x1920xf32>
    %58 = arith.mulf %57, %56 : vector<2x1920xf32>
    %59 = arith.mulf %0, %58 : vector<2x1920xf32>
    %c0_14 = arith.constant 0 : index
    %c0_15 = arith.constant 0 : index
    %60 = vector.load %arg3[%c0_14, %c0_15] : memref<2x1920xf32, #tpu.memory_space<vmem>>, vector<2x1920xf32>
    tpu.vector_store %arg3[%c0_14, %c0_15], %59 {strides = array<i32>} : memref<2x1920xf32, #tpu.memory_space<vmem>>, vector<2x1920xf32>,
    return
  }
  func.func @transform_0(%arg0: i32) -> (i32, i32) {
    %c0_i32 = arith.constant 0 : i32
    %c0_i32_0 = arith.constant 0 : i32
    %c0_i32_1 = arith.constant 0 : i32
    return %c0_i32, %c0_i32_0 : i32, i32
  }
  func.func @transform_1(%arg0: i32) -> (i32, i32) {
    %c0_i32 = arith.constant 0 : i32
    %c0_i32_0 = arith.constant 0 : i32
    return %arg0, %c0_i32 : i32, i32
  }
  func.func @transform_2(%arg0: i32) -> (i32, i32) {
    %c0_i32 = arith.constant 0 : i32
    %c0_i32_0 = arith.constant 0 : i32
    return %arg0, %c0_i32 : i32, i32
  }
}

</mosaic_0001>

<llo_original>
// kernel: _self_gate_impl.1
$region0: #{_self_gate_impl.1}
  #allocation0 [shape = 'u32[]', space=smem, size = 0x4, offset = 0x4, fixed_abs, tag = 'smem constant byte address 0x4 - core index']
  #allocation1 [shape = 'u32[144,128]{1,0:T(1,128)}', space=vmem, size = 0x12000, scoped, tag = 'internal scratch']
  %s0 = inlined_call_operand.vmem [shape: f32[11,1920], index: 0, kind: input, shape index: {}]
  %s1 = inlined_call_operand.vmem [shape: f32[2,1920], index: 1, kind: input, shape index: {}]
  %s2 = inlined_call_operand.vmem [shape: f32[2,1920], index: 2, kind: output, shape index: {}]
  %s3 = sld [smem:[#allocation0]]
  $region18: #{_self_gate_impl.1} parent=0
    _
  %s5 = ssub.s32 1, %s3
  %s6 = scalar_select 0, %s5, %s3
  // Predicated region
  $region2: #{_self_gate_impl.1} parent=0 // pred_check
    _
  $region3: #{_self_gate_impl.1} parent=0 // pred_check_branch
    %8 = sbr.rel (0) target = $region5
  $region4: #{_self_gate_impl.1} parent=0 // pred_region
    _
  $region5: #{_self_gate_impl.1} parent=0 // pred_fallthru
    _
  // Predicated region
  $region6: #{_self_gate_impl.1} parent=0 // pred_check
    _
  $region7: #{_self_gate_impl.1} parent=0 // pred_check_branch
    %10 = sbr.rel (0) target = $region9
  $region8: #{_self_gate_impl.1} parent=0 // pred_region
    _
  $region9: #{_self_gate_impl.1} parent=0 // pred_fallthru
    _
  %v11 = vld [vmem:[%s1] sm:$0xff]
  %v12 = vld [vmem:[%s1 + $0x8] sm:$0xff]
  %v13 = vld [vmem:[%s1 + $0x10] sm:$0xff]
  %v14 = vld [vmem:[%s1 + $0x18] sm:$0x3f]
  %v15 = vmul.f32 %v11, %v11
  %v16 = vmul.f32 %v12, %v12
  %v17 = vmul.f32 %v13, %v13
  %v18 = vmul.f32 %v14, %v14
  %s19 = scalar_lea.vmem %s0, 4
  %v20 = vld [vmem:[%s19] ss:$8 sm:$0xf]
  %v21 = vld [vmem:[%s19] ss:$8 sm:$0xf0]
  %v22 = vor.u32 %v20, %v21
  %s23 = scalar_lea.vmem %s0, 68
  %v24 = vld [vmem:[%s23] ss:$8 sm:$0xf]
  %v25 = vld [vmem:[%s23] ss:$8 sm:$0xf0]
  %v26 = vor.u32 %v24, %v25
  %v29 = vlaneseq
  %v30 = vshrl.u32 %v29, 7
  %v31 = vsub.s32 0, %v30
  %v32 = vrot.slane %v22, %v31
  %v33 = vlaneseq
  %v34 = vshrl.u32 %v33, 7
  %v35 = vsub.s32 1, %v34
  %v36 = vrot.slane %v22, %v35
  %v37 = vlaneseq
  %v38 = vshrl.u32 %v37, 7
  %v39 = vsub.s32 2, %v38
  %v40 = vrot.slane %v22, %v39
  %v41 = vlaneseq
  %v42 = vshrl.u32 %v41, 7
  %v43 = vsub.s32 3, %v42
  %v44 = vrot.slane %v22, %v43
  %v45 = vlaneseq
  %v46 = vshrl.u32 %v45, 7
  %v47 = vsub.s32 4, %v46
  %v48 = vrot.slane %v22, %v47
  %v49 = vlaneseq
  %v50 = vshrl.u32 %v49, 7
  %v51 = vsub.s32 5, %v50
  %v52 = vrot.slane %v22, %v51
  %v53 = vlaneseq
  %v54 = vshrl.u32 %v53, 7
  %v55 = vsub.s32 6, %v54
  %v56 = vrot.slane %v22, %v55
  %v57 = vlaneseq
  %v58 = vshrl.u32 %v57, 7
  %v59 = vsub.s32 7, %v58
  %v60 = vrot.slane %v22, %v59
  %v61 = vlaneseq
  %v62 = vshrl.u32 %v61, 7
  %v63 = vsub.s32 0, %v62
  %v64 = vrot.slane %v26, %v63
  %v65 = vlaneseq
  %v66 = vshrl.u32 %v65, 7
  %v67 = vsub.s32 1, %v66
  %v68 = vrot.slane %v26, %v67
  %v69 = vlaneseq
  %v70 = vshrl.u32 %v69, 7
  %v71 = vsub.s32 2, %v70
  %v72 = vrot.slane %v26, %v71
  %v73 = vlaneseq
  %v74 = vshrl.u32 %v73, 7
  %v75 = vsub.s32 3, %v74
  %v76 = vrot.slane %v26, %v75
  %v77 = vlaneseq
  %v78 = vshrl.u32 %v77, 7
  %v79 = vsub.s32 4, %v78
  %v80 = vrot.slane %v26, %v79
  %v81 = vlaneseq
  %v82 = vshrl.u32 %v81, 7
  %v83 = vsub.s32 5, %v82
  %v84 = vrot.slane %v26, %v83
  %v85 = vlaneseq
  %v86 = vshrl.u32 %v85, 7
  %v87 = vsub.s32 6, %v86
  %v88 = vrot.slane %v26, %v87
  %v108 = vcombine.high %v15, %v15
  %v110 = vunpack.c.l.s4 1983009808
  %v111 = vunpack.c.0.s8 %v110
  %v112 = vlaneseq
  %v113 = vshrl.u32 %v112, 7
  %v114 = vsub.s32 %v111, %v113
  %v115 = vrot.slane %v15, %v114
  %v117 = vunpack.c.l.s4 1983009808
  %v118 = vunpack.c.0.s8 %v117
  %v119 = vlaneseq
  %v120 = vshrl.u32 %v119, 7
  %v121 = vsub.s32 %v118, %v120
  %v122 = vrot.slane %v108, %v121
  %v123 = vcombine.high %v115, %v115
  %v124 = vcombine.high %v122, %v122
  %v125 = vcombine.high %v16, %v16
  %v127 = vunpack.c.l.s4 1983009808
  %v128 = vunpack.c.0.s8 %v127
  %v129 = vlaneseq
  %v130 = vshrl.u32 %v129, 7
  %v131 = vsub.s32 %v128, %v130
  %v132 = vrot.slane %v16, %v131
  %v134 = vunpack.c.l.s4 1983009808
  %v135 = vunpack.c.0.s8 %v134
  %v136 = vlaneseq
  %v137 = vshrl.u32 %v136, 7
  %v138 = vsub.s32 %v135, %v137
  %v139 = vrot.slane %v125, %v138
  %v140 = vcombine.high %v132, %v132
  %v141 = vcombine.high %v139, %v139
  %v142 = vcombine.high %v17, %v17
  %v144 = vunpack.c.l.s4 1983009808
  %v145 = vunpack.c.0.s8 %v144
  %v146 = vlaneseq
  %v147 = vshrl.u32 %v146, 7
  %v148 = vsub.s32 %v145, %v147
  %v149 = vrot.slane %v17, %v148
  %v151 = vunpack.c.l.s4 1983009808
  %v152 = vunpack.c.0.s8 %v151
  %v153 = vlaneseq
  %v154 = vshrl.u32 %v153, 7
  %v155 = vsub.s32 %v152, %v154
  %v156 = vrot.slane %v142, %v155
  %v157 = vcombine.high %v149, %v149
  %v158 = vcombine.high %v156, %v156
  %v159 = vcombine.high %v18, %v18
  %v161 = vunpack.c.l.s4 1983009808
  %v162 = vunpack.c.0.s8 %v161
  %v163 = vlaneseq
  %v164 = vshrl.u32 %v163, 7
  %v165 = vsub.s32 %v162, %v164
  %v166 = vrot.slane %v18, %v165
  %v168 = vunpack.c.l.s4 1983009808
  %v169 = vunpack.c.0.s8 %v168
  %v170 = vlaneseq
  %v171 = vshrl.u32 %v170, 7
  %v172 = vsub.s32 %v169, %v171
  %v173 = vrot.slane %v159, %v172
  %v174 = vcombine.high %v166, %v166
  %v190 = vmul.f32 %v32, %v115
  %v191 = vmul.f32 %v36, %v123
  %v192 = vmul.f32 %v40, %v122
  %v193 = vmul.f32 %v44, %v124
  %v194 = vmul.f32 %v48, %v132
  %v195 = vmul.f32 %v52, %v140
  %v196 = vmul.f32 %v56, %v139
  %v197 = vmul.f32 %v60, %v141
  %v198 = vmul.f32 %v64, %v149
  %v199 = vmul.f32 %v68, %v157
  %v200 = vmul.f32 %v72, %v156
  %v201 = vmul.f32 %v76, %v158
  %v202 = vmul.f32 %v80, %v166
  %v203 = vmul.f32 %v84, %v174
  %v204 = vmul.f32 %v88, %v173
  %s205 = scalar_lea.vmem %s0, 5
  %v206 = vld [vmem:[%s205] ss:$8 sm:$0xf]
  %v207 = vld [vmem:[%s205] ss:$8 sm:$0xf0]
  %v208 = vor.u32 %v206, %v207
  %s209 = scalar_lea.vmem %s0, 69
  %v210 = vld [vmem:[%s209] ss:$8 sm:$0xf]
  %v211 = vld [vmem:[%s209] ss:$8 sm:$0xf0]
  %v212 = vor.u32 %v210, %v211
  %213 = vrot.lane.b32.xlu0 %v115, 127
  %v214 = vpop.permute.xlu0 %213
  %215 = vrot.lane.b32.xlu0 %v123, 127
  %v216 = vpop.permute.xlu0 %215
  %217 = vrot.lane.b32.xlu0 %v122, 127
  %v218 = vpop.permute.xlu0 %217
  %219 = vrot.lane.b32.xlu0 %v124, 127
  %v220 = vpop.permute.xlu0 %219
  %221 = vrot.lane.b32.xlu0 %v132, 127
  %v222 = vpop.permute.xlu0 %221
  %223 = vrot.lane.b32.xlu0 %v140, 127
  %v224 = vpop.permute.xlu0 %223
  %225 = vrot.lane.b32.xlu0 %v139, 127
  %v226 = vpop.permute.xlu0 %225
  %227 = vrot.lane.b32.xlu0 %v141, 127
  %v228 = vpop.permute.xlu0 %227
  %229 = vrot.lane.b32.xlu0 %v149, 127
  %v230 = vpop.permute.xlu0 %229
  %231 = vrot.lane.b32.xlu0 %v157, 127
  %v232 = vpop.permute.xlu0 %231
  %233 = vrot.lane.b32.xlu0 %v156, 127
  %v234 = vpop.permute.xlu0 %233
  %235 = vrot.lane.b32.xlu0 %v158, 127
  %v236 = vpop.permute.xlu0 %235
  %237 = vrot.lane.b32.xlu0 %v166, 127
  %v238 = vpop.permute.xlu0 %237
  %239 = vrot.lane.b32.xlu0 %v174, 127
  %v240 = vpop.permute.xlu0 %239
  %241 = vrot.lane.b32.xlu0 %v173, 127
  %v242 = vpop.permute.xlu0 %241
  %v243 = vlaneseq
  %v244 = vand.u32 %v243, 127
  %vm245 = vcmp.lt.s32.totalorder %v244, 127
  %v246 = vsel %vm245, %v240, %v242
  %v247 = vsel %vm245, %v238, %v240
  %v248 = vsel %vm245, %v236, %v238
  %v249 = vsel %vm245, %v234, %v236
  %v250 = vsel %vm245, %v232, %v234
  %v251 = vsel %vm245, %v230, %v232
  %v252 = vsel %vm245, %v228, %v230
  %v253 = vsel %vm245, %v226, %v228
  %v254 = vsel %vm245, %v224, %v226
  %v255 = vsel %vm245, %v222, %v224
  %v256 = vsel %vm245, %v220, %v222
  %v257 = vsel %vm245, %v218, %v220
  %v258 = vsel %vm245, %v216, %v218
  %v259 = vsel %vm245, %v214, %v216
  %v260 = vsel %vm245, %v242, %v214
  %v263 = vlaneseq
  %v264 = vshrl.u32 %v263, 7
  %v265 = vsub.s32 0, %v264
  %v266 = vrot.slane %v208, %v265
  %v267 = vlaneseq
  %v268 = vshrl.u32 %v267, 7
  %v269 = vsub.s32 1, %v268
  %v270 = vrot.slane %v208, %v269
  %v271 = vlaneseq
  %v272 = vshrl.u32 %v271, 7
  %v273 = vsub.s32 2, %v272
  %v274 = vrot.slane %v208, %v273
  %v275 = vlaneseq
  %v276 = vshrl.u32 %v275, 7
  %v277 = vsub.s32 3, %v276
  %v278 = vrot.slane %v208, %v277
  %v279 = vlaneseq
  %v280 = vshrl.u32 %v279, 7
  %v281 = vsub.s32 4, %v280
  %v282 = vrot.slane %v208, %v281
  %v283 = vlaneseq
  %v284 = vshrl.u32 %v283, 7
  %v285 = vsub.s32 5, %v284
  %v286 = vrot.slane %v208, %v285
  %v287 = vlaneseq
  %v288 = vshrl.u32 %v287, 7
  %v289 = vsub.s32 6, %v288
  %v290 = vrot.slane %v208, %v289
  %v291 = vlaneseq
  %v292 = vshrl.u32 %v291, 7
  %v293 = vsub.s32 7, %v292
  %v294 = vrot.slane %v208, %v293
  %v295 = vlaneseq
  %v296 = vshrl.u32 %v295, 7
  %v297 = vsub.s32 0, %v296
  %v298 = vrot.slane %v212, %v297
  %v299 = vlaneseq
  %v300 = vshrl.u32 %v299, 7
  %v301 = vsub.s32 1, %v300
  %v302 = vrot.slane %v212, %v301
  %v303 = vlaneseq
  %v304 = vshrl.u32 %v303, 7
  %v305 = vsub.s32 2, %v304
  %v306 = vrot.slane %v212, %v305
  %v307 = vlaneseq
  %v308 = vshrl.u32 %v307, 7
  %v309 = vsub.s32 3, %v308
  %v310 = vrot.slane %v212, %v309
  %v311 = vlaneseq
  %v312 = vshrl.u32 %v311, 7
  %v313 = vsub.s32 4, %v312
  %v314 = vrot.slane %v212, %v313
  %v315 = vlaneseq
  %v316 = vshrl.u32 %v315, 7
  %v317 = vsub.s32 5, %v316
  %v318 = vrot.slane %v212, %v317
  %v319 = vlaneseq
  %v320 = vshrl.u32 %v319, 7
  %v321 = vsub.s32 6, %v320
  %v322 = vrot.slane %v212, %v321
  %v338 = vmul.f32 %v266, %v259
  %v339 = vmul.f32 %v270, %v258
  %v340 = vmul.f32 %v274, %v257
  %v341 = vmul.f32 %v278, %v256
  %v342 = vmul.f32 %v282, %v255
  %v343 = vmul.f32 %v286, %v254
  %v344 = vmul.f32 %v290, %v253
  %v345 = vmul.f32 %v294, %v252
  %v346 = vmul.f32 %v298, %v251
  %v347 = vmul.f32 %v302, %v250
  %v348 = vmul.f32 %v306, %v249
  %v349 = vmul.f32 %v310, %v248
  %v350 = vmul.f32 %v314, %v247
  %v351 = vmul.f32 %v318, %v246
  %v352 = vmul.f32 %v322, %v260
  %v353 = vadd.f32 %v190, %v338
  %v354 = vadd.f32 %v191, %v339
  %v355 = vadd.f32 %v192, %v340
  %v356 = vadd.f32 %v193, %v341
  %v357 = vadd.f32 %v194, %v342
  %v358 = vadd.f32 %v195, %v343
  %v359 = vadd.f32 %v196, %v344
  %v360 = vadd.f32 %v197, %v345
  %v361 = vadd.f32 %v198, %v346
  %v362 = vadd.f32 %v199, %v347
  %v363 = vadd.f32 %v200, %v348
  %v364 = vadd.f32 %v201, %v349
  %v365 = vadd.f32 %v202, %v350
  %v366 = vadd.f32 %v203, %v351
  %v367 = vadd.f32 %v204, %v352
  %s368 = scalar_lea.vmem %s0, 3
  %v369 = vld [vmem:[%s368] ss:$8 sm:$0xf]
  %v370 = vld [vmem:[%s368] ss:$8 sm:$0xf0]
  %v371 = vor.u32 %v369, %v370
  %s372 = scalar_lea.vmem %s0, 67
  %v373 = vld [vmem:[%s372] ss:$8 sm:$0xf]
  %v374 = vld [vmem:[%s372] ss:$8 sm:$0xf0]
  %v375 = vor.u32 %v373, %v374
  %376 = vrot.lane.b32.xlu0 %v115, 1
  %v377 = vpop.permute.xlu0 %376
  %378 = vrot.lane.b32.xlu0 %v123, 1
  %v379 = vpop.permute.xlu0 %378
  %380 = vrot.lane.b32.xlu0 %v122, 1
  %v381 = vpop.permute.xlu0 %380
  %382 = vrot.lane.b32.xlu0 %v124, 1
  %v383 = vpop.permute.xlu0 %382
  %384 = vrot.lane.b32.xlu0 %v132, 1
  %v385 = vpop.permute.xlu0 %384
  %386 = vrot.lane.b32.xlu0 %v140, 1
  %v387 = vpop.permute.xlu0 %386
  %388 = vrot.lane.b32.xlu0 %v139, 1
  %v389 = vpop.permute.xlu0 %388
  %390 = vrot.lane.b32.xlu0 %v141, 1
  %v391 = vpop.permute.xlu0 %390
  %392 = vrot.lane.b32.xlu0 %v149, 1
  %v393 = vpop.permute.xlu0 %392
  %394 = vrot.lane.b32.xlu0 %v157, 1
  %v395 = vpop.permute.xlu0 %394
  %396 = vrot.lane.b32.xlu0 %v156, 1
  %v397 = vpop.permute.xlu0 %396
  %398 = vrot.lane.b32.xlu0 %v158, 1
  %v399 = vpop.permute.xlu0 %398
  %400 = vrot.lane.b32.xlu0 %v166, 1
  %v401 = vpop.permute.xlu0 %400
  %402 = vrot.lane.b32.xlu0 %v174, 1
  %v403 = vpop.permute.xlu0 %402
  %404 = vrot.lane.b32.xlu0 %v173, 1
  %v405 = vpop.permute.xlu0 %404
  %vm406 = vcmp.lt.s32.totalorder %v244, 1
  %v407 = vsel %vm406, %v403, %v405
  %v408 = vsel %vm406, %v401, %v403
  %v409 = vsel %vm406, %v399, %v401
  %v410 = vsel %vm406, %v397, %v399
  %v411 = vsel %vm406, %v395, %v397
  %v412 = vsel %vm406, %v393, %v395
  %v413 = vsel %vm406, %v391, %v393
  %v414 = vsel %vm406, %v389, %v391
  %v415 = vsel %vm406, %v387, %v389
  %v416 = vsel %vm406, %v385, %v387
  %v417 = vsel %vm406, %v383, %v385
  %v418 = vsel %vm406, %v381, %v383
  %v419 = vsel %vm406, %v379, %v381
  %v420 = vsel %vm406, %v377, %v379
  %v421 = vsel %vm406, %v405, %v377
  %v424 = vlaneseq
  %v425 = vshrl.u32 %v424, 7
  %v426 = vsub.s32 0, %v425
  %v427 = vrot.slane %v371, %v426
  %v428 = vlaneseq
  %v429 = vshrl.u32 %v428, 7
  %v430 = vsub.s32 1, %v429
  %v431 = vrot.slane %v371, %v430
  %v432 = vlaneseq
  %v433 = vshrl.u32 %v432, 7
  %v434 = vsub.s32 2, %v433
  %v435 = vrot.slane %v371, %v434
  %v436 = vlaneseq
  %v437 = vshrl.u32 %v436, 7
  %v438 = vsub.s32 3, %v437
  %v439 = vrot.slane %v371, %v438
  %v440 = vlaneseq
  %v441 = vshrl.u32 %v440, 7
  %v442 = vsub.s32 4, %v441
  %v443 = vrot.slane %v371, %v442
  %v444 = vlaneseq
  %v445 = vshrl.u32 %v444, 7
  %v446 = vsub.s32 5, %v445
  %v447 = vrot.slane %v371, %v446
  %v448 = vlaneseq
  %v449 = vshrl.u32 %v448, 7
  %v450 = vsub.s32 6, %v449
  %v451 = vrot.slane %v371, %v450
  %v452 = vlaneseq
  %v453 = vshrl.u32 %v452, 7
  %v454 = vsub.s32 7, %v453
  %v455 = vrot.slane %v371, %v454
  %v456 = vlaneseq
  %v457 = vshrl.u32 %v456, 7
  %v458 = vsub.s32 0, %v457
  %v459 = vrot.slane %v375, %v458
  %v460 = vlaneseq
  %v461 = vshrl.u32 %v460, 7
  %v462 = vsub.s32 1, %v461
  %v463 = vrot.slane %v375, %v462
  %v464 = vlaneseq
  %v465 = vshrl.u32 %v464, 7
  %v466 = vsub.s32 2, %v465
  %v467 = vrot.slane %v375, %v466
  %v468 = vlaneseq
  %v469 = vshrl.u32 %v468, 7
  %v470 = vsub.s32 3, %v469
  %v471 = vrot.slane %v375, %v470
  %v472 = vlaneseq
  %v473 = vshrl.u32 %v472, 7
  %v474 = vsub.s32 4, %v473
  %v475 = vrot.slane %v375, %v474
  %v476 = vlaneseq
  %v477 = vshrl.u32 %v476, 7
  %v478 = vsub.s32 5, %v477
  %v479 = vrot.slane %v375, %v478
  %v480 = vlaneseq
  %v481 = vshrl.u32 %v480, 7
  %v482 = vsub.s32 6, %v481
  %v483 = vrot.slane %v375, %v482
  %v499 = vmul.f32 %v427, %v421
  %v500 = vmul.f32 %v431, %v420
  %v501 = vmul.f32 %v435, %v419
  %v502 = vmul.f32 %v439, %v418
  %v503 = vmul.f32 %v443, %v417
  %v504 = vmul.f32 %v447, %v416
  %v505 = vmul.f32 %v451, %v415
  %v506 = vmul.f32 %v455, %v414
  %v507 = vmul.f32 %v459, %v413
  %v508 = vmul.f32 %v463, %v412
  %v509 = vmul.f32 %v467, %v411
  %v510 = vmul.f32 %v471, %v410
  %v511 = vmul.f32 %v475, %v409
  %v512 = vmul.f32 %v479, %v408
  %v513 = vmul.f32 %v483, %v407
  %v514 = vadd.f32 %v353, %v499
  %v515 = vadd.f32 %v354, %v500
  %v516 = vadd.f32 %v355, %v501
  %v517 = vadd.f32 %v356, %v502
  %v518 = vadd.f32 %v357, %v503
  %v519 = vadd.f32 %v358, %v504
  %v520 = vadd.f32 %v359, %v505
  %v521 = vadd.f32 %v360, %v506
  %v522 = vadd.f32 %v361, %v507
  %v523 = vadd.f32 %v362, %v508
  %v524 = vadd.f32 %v363, %v509
  %v525 = vadd.f32 %v364, %v510
  %v526 = vadd.f32 %v365, %v511
  %v527 = vadd.f32 %v366, %v512
  %v528 = vadd.f32 %v367, %v513
  %s529 = scalar_lea.vmem %s0, 6
  %v530 = vld [vmem:[%s529] ss:$8 sm:$0xf]
  %v531 = vld [vmem:[%s529] ss:$8 sm:$0xf0]
  %v532 = vor.u32 %v530, %v531
  %s533 = scalar_lea.vmem %s0, 70
  %v534 = vld [vmem:[%s533] ss:$8 sm:$0xf]
  %v535 = vld [vmem:[%s533] ss:$8 sm:$0xf0]
  %v536 = vor.u32 %v534, %v535
  %537 = vrot.lane.b32.xlu0 %v115, 126
  %v538 = vpop.permute.xlu0 %537
  %539 = vrot.lane.b32.xlu0 %v123, 126
  %v540 = vpop.permute.xlu0 %539
  %541 = vrot.lane.b32.xlu0 %v122, 126
  %v542 = vpop.permute.xlu0 %541
  %543 = vrot.lane.b32.xlu0 %v124, 126
  %v544 = vpop.permute.xlu0 %543
  %545 = vrot.lane.b32.xlu0 %v132, 126
  %v546 = vpop.permute.xlu0 %545
  %547 = vrot.lane.b32.xlu0 %v140, 126
  %v548 = vpop.permute.xlu0 %547
  %549 = vrot.lane.b32.xlu0 %v139, 126
  %v550 = vpop.permute.xlu0 %549
  %551 = vrot.lane.b32.xlu0 %v141, 126
  %v552 = vpop.permute.xlu0 %551
  %553 = vrot.lane.b32.xlu0 %v149, 126
  %v554 = vpop.permute.xlu0 %553
  %555 = vrot.lane.b32.xlu0 %v157, 126
  %v556 = vpop.permute.xlu0 %555
  %557 = vrot.lane.b32.xlu0 %v156, 126
  %v558 = vpop.permute.xlu0 %557
  %559 = vrot.lane.b32.xlu0 %v158, 126
  %v560 = vpop.permute.xlu0 %559
  %561 = vrot.lane.b32.xlu0 %v166, 126
  %v562 = vpop.permute.xlu0 %561
  %563 = vrot.lane.b32.xlu0 %v174, 126
  %v564 = vpop.permute.xlu0 %563
  %565 = vrot.lane.b32.xlu0 %v173, 126
  %v566 = vpop.permute.xlu0 %565
  %vm567 = vcmp.lt.s32.totalorder %v244, 126
  %v568 = vsel %vm567, %v564, %v566
  %v569 = vsel %vm567, %v562, %v564
  %v570 = vsel %vm567, %v560, %v562
  %v571 = vsel %vm567, %v558, %v560
  %v572 = vsel %vm567, %v556, %v558
  %v573 = vsel %vm567, %v554, %v556
  %v574 = vsel %vm567, %v552, %v554
  %v575 = vsel %vm567, %v550, %v552
  %v576 = vsel %vm567, %v548, %v550
  %v577 = vsel %vm567, %v546, %v548
  %v578 = vsel %vm567, %v544, %v546
  %v579 = vsel %vm567, %v542, %v544
  %v580 = vsel %vm567, %v540, %v542
  %v581 = vsel %vm567, %v538, %v540
  %v582 = vsel %vm567, %v566, %v538
  %v585 = vlaneseq
  %v586 = vshrl.u32 %v585, 7
  %v587 = vsub.s32 0, %v586
  %v588 = vrot.slane %v532, %v587
  %v589 = vlaneseq
  %v590 = vshrl.u32 %v589, 7
  %v591 = vsub.s32 1, %v590
  %v592 = vrot.slane %v532, %v591
  %v593 = vlaneseq
  %v594 = vshrl.u32 %v593, 7
  %v595 = vsub.s32 2, %v594
  %v596 = vrot.slane %v532, %v595
  %v597 = vlaneseq
  %v598 = vshrl.u32 %v597, 7
  %v599 = vsub.s32 3, %v598
  %v600 = vrot.slane %v532, %v599
  %v601 = vlaneseq
  %v602 = vshrl.u32 %v601, 7
  %v603 = vsub.s32 4, %v602
  %v604 = vrot.slane %v532, %v603
  %v605 = vlaneseq
  %v606 = vshrl.u32 %v605, 7
  %v607 = vsub.s32 5, %v606
  %v608 = vrot.slane %v532, %v607
  %v609 = vlaneseq
  %v610 = vshrl.u32 %v609, 7
  %v611 = vsub.s32 6, %v610
  %v612 = vrot.slane %v532, %v611
  %v613 = vlaneseq
  %v614 = vshrl.u32 %v613, 7
  %v615 = vsub.s32 7, %v614
  %v616 = vrot.slane %v532, %v615
  %v617 = vlaneseq
  %v618 = vshrl.u32 %v617, 7
  %v619 = vsub.s32 0, %v618
  %v620 = vrot.slane %v536, %v619
  %v621 = vlaneseq
  %v622 = vshrl.u32 %v621, 7
  %v623 = vsub.s32 1, %v622
  %v624 = vrot.slane %v536, %v623
  %v625 = vlaneseq
  %v626 = vshrl.u32 %v625, 7
  %v627 = vsub.s32 2, %v626
  %v628 = vrot.slane %v536, %v627
  %v629 = vlaneseq
  %v630 = vshrl.u32 %v629, 7
  %v631 = vsub.s32 3, %v630
  %v632 = vrot.slane %v536, %v631
  %v633 = vlaneseq
  %v634 = vshrl.u32 %v633, 7
  %v635 = vsub.s32 4, %v634
  %v636 = vrot.slane %v536, %v635
  %v637 = vlaneseq
  %v638 = vshrl.u32 %v637, 7
  %v639 = vsub.s32 5, %v638
  %v640 = vrot.slane %v536, %v639
  %v641 = vlaneseq
  %v642 = vshrl.u32 %v641, 7
  %v643 = vsub.s32 6, %v642
  %v644 = vrot.slane %v536, %v643
  %v660 = vmul.f32 %v588, %v581
  %v661 = vmul.f32 %v592, %v580
  %v662 = vmul.f32 %v596, %v579
  %v663 = vmul.f32 %v600, %v578
  %v664 = vmul.f32 %v604, %v577
  %v665 = vmul.f32 %v608, %v576
  %v666 = vmul.f32 %v612, %v575
  %v667 = vmul.f32 %v616, %v574
  %v668 = vmul.f32 %v620, %v573
  %v669 = vmul.f32 %v624, %v572
  %v670 = vmul.f32 %v628, %v571
  %v671 = vmul.f32 %v632, %v570
  %v672 = vmul.f32 %v636, %v569
  %v673 = vmul.f32 %v640, %v568
  %v674 = vmul.f32 %v644, %v582
  %v675 = vadd.f32 %v514, %v660
  %v676 = vadd.f32 %v515, %v661
  %v677 = vadd.f32 %v516, %v662
  %v678 = vadd.f32 %v517, %v663
  %v679 = vadd.f32 %v518, %v664
  %v680 = vadd.f32 %v519, %v665
  %v681 = vadd.f32 %v520, %v666
  %v682 = vadd.f32 %v521, %v667
  %v683 = vadd.f32 %v522, %v668
  %v684 = vadd.f32 %v523, %v669
  %v685 = vadd.f32 %v524, %v670
  %v686 = vadd.f32 %v525, %v671
  %v687 = vadd.f32 %v526, %v672
  %v688 = vadd.f32 %v527, %v673
  %v689 = vadd.f32 %v528, %v674
  %s690 = scalar_lea.vmem %s0, 2
  %v691 = vld [vmem:[%s690] ss:$8 sm:$0xf]
  %v692 = vld [vmem:[%s690] ss:$8 sm:$0xf0]
  %v693 = vor.u32 %v691, %v692
  %s694 = scalar_lea.vmem %s0, 66
  %v695 = vld [vmem:[%s694] ss:$8 sm:$0xf]
  %v696 = vld [vmem:[%s694] ss:$8 sm:$0xf0]
  %v697 = vor.u32 %v695, %v696
  %698 = vrot.lane.b32.xlu0 %v115, 2
  %v699 = vpop.permute.xlu0 %698
  %700 = vrot.lane.b32.xlu0 %v123, 2
  %v701 = vpop.permute.xlu0 %700
  %702 = vrot.lane.b32.xlu0 %v122, 2
  %v703 = vpop.permute.xlu0 %702
  %704 = vrot.lane.b32.xlu0 %v124, 2
  %v705 = vpop.permute.xlu0 %704
  %706 = vrot.lane.b32.xlu0 %v132, 2
  %v707 = vpop.permute.xlu0 %706
  %708 = vrot.lane.b32.xlu0 %v140, 2
  %v709 = vpop.permute.xlu0 %708
  %710 = vrot.lane.b32.xlu0 %v139, 2
  %v711 = vpop.permute.xlu0 %710
  %712 = vrot.lane.b32.xlu0 %v141, 2
  %v713 = vpop.permute.xlu0 %712
  %714 = vrot.lane.b32.xlu0 %v149, 2
  %v715 = vpop.permute.xlu0 %714
  %716 = vrot.lane.b32.xlu0 %v157, 2
  %v717 = vpop.permute.xlu0 %716
  %718 = vrot.lane.b32.xlu0 %v156, 2
  %v719 = vpop.permute.xlu0 %718
  %720 = vrot.lane.b32.xlu0 %v158, 2
  %v721 = vpop.permute.xlu0 %720
  %722 = vrot.lane.b32.xlu0 %v166, 2
  %v723 = vpop.permute.xlu0 %722
  %724 = vrot.lane.b32.xlu0 %v174, 2
  %v725 = vpop.permute.xlu0 %724
  %726 = vrot.lane.b32.xlu0 %v173, 2
  %v727 = vpop.permute.xlu0 %726
  %vm728 = vcmp.lt.s32.totalorder %v244, 2
  %v729 = vsel %vm728, %v725, %v727
  %v730 = vsel %vm728, %v723, %v725
  %v731 = vsel %vm728, %v721, %v723
  %v732 = vsel %vm728, %v719, %v721
  %v733 = vsel %vm728, %v717, %v719
  %v734 = vsel %vm728, %v715, %v717
  %v735 = vsel %vm728, %v713, %v715
  %v736 = vsel %vm728, %v711, %v713
  %v737 = vsel %vm728, %v709, %v711
  %v738 = vsel %vm728, %v707, %v709
  %v739 = vsel %vm728, %v705, %v707
  %v740 = vsel %vm728, %v703, %v705
  %v741 = vsel %vm728, %v701, %v703
  %v742 = vsel %vm728, %v699, %v701
  %v743 = vsel %vm728, %v727, %v699
  %v746 = vlaneseq
  %v747 = vshrl.u32 %v746, 7
  %v748 = vsub.s32 0, %v747
  %v749 = vrot.slane %v693, %v748
  %v750 = vlaneseq
  %v751 = vshrl.u32 %v750, 7
  %v752 = vsub.s32 1, %v751
  %v753 = vrot.slane %v693, %v752
  %v754 = vlaneseq
  %v755 = vshrl.u32 %v754, 7
  %v756 = vsub.s32 2, %v755
  %v757 = vrot.slane %v693, %v756
  %v758 = vlaneseq
  %v759 = vshrl.u32 %v758, 7
  %v760 = vsub.s32 3, %v759
  %v761 = vrot.slane %v693, %v760
  %v762 = vlaneseq
  %v763 = vshrl.u32 %v762, 7
  %v764 = vsub.s32 4, %v763
  %v765 = vrot.slane %v693, %v764
  %v766 = vlaneseq
  %v767 = vshrl.u32 %v766, 7
  %v768 = vsub.s32 5, %v767
  %v769 = vrot.slane %v693, %v768
  %v770 = vlaneseq
  %v771 = vshrl.u32 %v770, 7
  %v772 = vsub.s32 6, %v771
  %v773 = vrot.slane %v693, %v772
  %v774 = vlaneseq
  %v775 = vshrl.u32 %v774, 7
  %v776 = vsub.s32 7, %v775
  %v777 = vrot.slane %v693, %v776
  %v778 = vlaneseq
  %v779 = vshrl.u32 %v778, 7
  %v780 = vsub.s32 0, %v779
  %v781 = vrot.slane %v697, %v780
  %v782 = vlaneseq
  %v783 = vshrl.u32 %v782, 7
  %v784 = vsub.s32 1, %v783
  %v785 = vrot.slane %v697, %v784
  %v786 = vlaneseq
  %v787 = vshrl.u32 %v786, 7
  %v788 = vsub.s32 2, %v787
  %v789 = vrot.slane %v697, %v788
  %v790 = vlaneseq
  %v791 = vshrl.u32 %v790, 7
  %v792 = vsub.s32 3, %v791
  %v793 = vrot.slane %v697, %v792
  %v794 = vlaneseq
  %v795 = vshrl.u32 %v794, 7
  %v796 = vsub.s32 4, %v795
  %v797 = vrot.slane %v697, %v796
  %v798 = vlaneseq
  %v799 = vshrl.u32 %v798, 7
  %v800 = vsub.s32 5, %v799
  %v801 = vrot.slane %v697, %v800
  %v802 = vlaneseq
  %v803 = vshrl.u32 %v802, 7
  %v804 = vsub.s32 6, %v803
  %v805 = vrot.slane %v697, %v804
  %v821 = vmul.f32 %v749, %v743
  %v822 = vmul.f32 %v753, %v742
  %v823 = vmul.f32 %v757, %v741
  %v824 = vmul.f32 %v761, %v740
  %v825 = vmul.f32 %v765, %v739
  %v826 = vmul.f32 %v769, %v738
  %v827 = vmul.f32 %v773, %v737
  %v828 = vmul.f32 %v777, %v736
  %v829 = vmul.f32 %v781, %v735
  %v830 = vmul.f32 %v785, %v734
  %v831 = vmul.f32 %v789, %v733
  %v832 = vmul.f32 %v793, %v732
  %v833 = vmul.f32 %v797, %v731
  %v834 = vmul.f32 %v801, %v730
  %v835 = vmul.f32 %v805, %v729
  %v836 = vadd.f32 %v675, %v821
  %v837 = vadd.f32 %v676, %v822
  %v838 = vadd.f32 %v677, %v823
  %v839 = vadd.f32 %v678, %v824
  %v840 = vadd.f32 %v679, %v825
  %v841 = vadd.f32 %v680, %v826
  %v842 = vadd.f32 %v681, %v827
  %v843 = vadd.f32 %v682, %v828
  %v844 = vadd.f32 %v683, %v829
  %v845 = vadd.f32 %v684, %v830
  %v846 = vadd.f32 %v685, %v831
  %v847 = vadd.f32 %v686, %v832
  %v848 = vadd.f32 %v687, %v833
  %v849 = vadd.f32 %v688, %v834
  %v850 = vadd.f32 %v689, %v835
  %s851 = scalar_lea.vmem %s0, 7
  %v852 = vld [vmem:[%s851] ss:$8 sm:$0xf]
  %v853 = vld [vmem:[%s851] ss:$8 sm:$0xf0]
  %v854 = vor.u32 %v852, %v853
  %s855 = scalar_lea.vmem %s0, 71
  %v856 = vld [vmem:[%s855] ss:$8 sm:$0xf]
  %v857 = vld [vmem:[%s855] ss:$8 sm:$0xf0]
  %v858 = vor.u32 %v856, %v857
  %859 = vrot.lane.b32.xlu0 %v115, 125
  %v860 = vpop.permute.xlu0 %859
  %861 = vrot.lane.b32.xlu0 %v123, 125
  %v862 = vpop.permute.xlu0 %861
  %863 = vrot.lane.b32.xlu0 %v122, 125
  %v864 = vpop.permute.xlu0 %863
  %865 = vrot.lane.b32.xlu0 %v124, 125
  %v866 = vpop.permute.xlu0 %865
  %867 = vrot.lane.b32.xlu0 %v132, 125
  %v868 = vpop.permute.xlu0 %867
  %869 = vrot.lane.b32.xlu0 %v140, 125
  %v870 = vpop.permute.xlu0 %869
  %871 = vrot.lane.b32.xlu0 %v139, 125
  %v872 = vpop.permute.xlu0 %871
  %873 = vrot.lane.b32.xlu0 %v141, 125
  %v874 = vpop.permute.xlu0 %873
  %875 = vrot.lane.b32.xlu0 %v149, 125
  %v876 = vpop.permute.xlu0 %875
  %877 = vrot.lane.b32.xlu0 %v157, 125
  %v878 = vpop.permute.xlu0 %877
  %879 = vrot.lane.b32.xlu0 %v156, 125
  %v880 = vpop.permute.xlu0 %879
  %881 = vrot.lane.b32.xlu0 %v158, 125
  %v882 = vpop.permute.xlu0 %881
  %883 = vrot.lane.b32.xlu0 %v166, 125
  %v884 = vpop.permute.xlu0 %883
  %885 = vrot.lane.b32.xlu0 %v174, 125
  %v886 = vpop.permute.xlu0 %885
  %887 = vrot.lane.b32.xlu0 %v173, 125
  %v888 = vpop.permute.xlu0 %887
  %vm889 = vcmp.lt.s32.totalorder %v244, 125
  %v890 = vsel %vm889, %v886, %v888
  %v891 = vsel %vm889, %v884, %v886
  %v892 = vsel %vm889, %v882, %v884
  %v893 = vsel %vm889, %v880, %v882
  %v894 = vsel %vm889, %v878, %v880
  %v895 = vsel %vm889, %v876, %v878
  %v896 = vsel %vm889, %v874, %v876
  %v897 = vsel %vm889, %v872, %v874
  %v898 = vsel %vm889, %v870, %v872
  %v899 = vsel %vm889, %v868, %v870
  %v900 = vsel %vm889, %v866, %v868
  %v901 = vsel %vm889, %v864, %v866
  %v902 = vsel %vm889, %v862, %v864
  %v903 = vsel %vm889, %v860, %v862
  %v904 = vsel %vm889, %v888, %v860
  %v907 = vlaneseq
  %v908 = vshrl.u32 %v907, 7
  %v909 = vsub.s32 0, %v908
  %v910 = vrot.slane %v854, %v909
  %v911 = vlaneseq
  %v912 = vshrl.u32 %v911, 7
  %v913 = vsub.s32 1, %v912
  %v914 = vrot.slane %v854, %v913
  %v915 = vlaneseq
  %v916 = vshrl.u32 %v915, 7
  %v917 = vsub.s32 2, %v916
  %v918 = vrot.slane %v854, %v917
  %v919 = vlaneseq
  %v920 = vshrl.u32 %v919, 7
  %v921 = vsub.s32 3, %v920
  %v922 = vrot.slane %v854, %v921
  %v923 = vlaneseq
  %v924 = vshrl.u32 %v923, 7
  %v925 = vsub.s32 4, %v924
  %v926 = vrot.slane %v854, %v925
  %v927 = vlaneseq
  %v928 = vshrl.u32 %v927, 7
  %v929 = vsub.s32 5, %v928
  %v930 = vrot.slane %v854, %v929
  %v931 = vlaneseq
  %v932 = vshrl.u32 %v931, 7
  %v933 = vsub.s32 6, %v932
  %v934 = vrot.slane %v854, %v933
  %v935 = vlaneseq
  %v936 = vshrl.u32 %v935, 7
  %v937 = vsub.s32 7, %v936
  %v938 = vrot.slane %v854, %v937
  %v939 = vlaneseq
  %v940 = vshrl.u32 %v939, 7
  %v941 = vsub.s32 0, %v940
  %v942 = vrot.slane %v858, %v941
  %v943 = vlaneseq
  %v944 = vshrl.u32 %v943, 7
  %v945 = vsub.s32 1, %v944
  %v946 = vrot.slane %v858, %v945
  %v947 = vlaneseq
  %v948 = vshrl.u32 %v947, 7
  %v949 = vsub.s32 2, %v948
  %v950 = vrot.slane %v858, %v949
  %v951 = vlaneseq
  %v952 = vshrl.u32 %v951, 7
  %v953 = vsub.s32 3, %v952
  %v954 = vrot.slane %v858, %v953
  %v955 = vlaneseq
  %v956 = vshrl.u32 %v955, 7
  %v957 = vsub.s32 4, %v956
  %v958 = vrot.slane %v858, %v957
  %v959 = vlaneseq
  %v960 = vshrl.u32 %v959, 7
  %v961 = vsub.s32 5, %v960
  %v962 = vrot.slane %v858, %v961
  %v963 = vlaneseq
  %v964 = vshrl.u32 %v963, 7
  %v965 = vsub.s32 6, %v964
  %v966 = vrot.slane %v858, %v965
  %v982 = vmul.f32 %v910, %v903
  %v983 = vmul.f32 %v914, %v902
  %v984 = vmul.f32 %v918, %v901
  %v985 = vmul.f32 %v922, %v900
  %v986 = vmul.f32 %v926, %v899
  %v987 = vmul.f32 %v930, %v898
  %v988 = vmul.f32 %v934, %v897
  %v989 = vmul.f32 %v938, %v896
  %v990 = vmul.f32 %v942, %v895
  %v991 = vmul.f32 %v946, %v894
  %v992 = vmul.f32 %v950, %v893
  %v993 = vmul.f32 %v954, %v892
  %v994 = vmul.f32 %v958, %v891
  %v995 = vmul.f32 %v962, %v890
  %v996 = vmul.f32 %v966, %v904
  %v997 = vadd.f32 %v836, %v982
  %v998 = vadd.f32 %v837, %v983
  %v999 = vadd.f32 %v838, %v984
  %v1000 = vadd.f32 %v839, %v985
  %v1001 = vadd.f32 %v840, %v986
  %v1002 = vadd.f32 %v841, %v987
  %v1003 = vadd.f32 %v842, %v988
  %v1004 = vadd.f32 %v843, %v989
  %v1005 = vadd.f32 %v844, %v990
  %v1006 = vadd.f32 %v845, %v991
  %v1007 = vadd.f32 %v846, %v992
  %v1008 = vadd.f32 %v847, %v993
  %v1009 = vadd.f32 %v848, %v994
  %v1010 = vadd.f32 %v849, %v995
  %v1011 = vadd.f32 %v850, %v996
  %s1012 = scalar_lea.vmem %s0, 1
  %v1013 = vld [vmem:[%s1012] ss:$8 sm:$0xf]
  %v1014 = vld [vmem:[%s1012] ss:$8 sm:$0xf0]
  %v1015 = vor.u32 %v1013, %v1014
  %s1016 = scalar_lea.vmem %s0, 65
  %v1017 = vld [vmem:[%s1016] ss:$8 sm:$0xf]
  %v1018 = vld [vmem:[%s1016] ss:$8 sm:$0xf0]
  %v1019 = vor.u32 %v1017, %v1018
  %1020 = vrot.lane.b32.xlu0 %v115, 3
  %v1021 = vpop.permute.xlu0 %1020
  %1022 = vrot.lane.b32.xlu0 %v123, 3
  %v1023 = vpop.permute.xlu0 %1022
  %1024 = vrot.lane.b32.xlu0 %v122, 3
  %v1025 = vpop.permute.xlu0 %1024
  %1026 = vrot.lane.b32.xlu0 %v124, 3
  %v1027 = vpop.permute.xlu0 %1026
  %1028 = vrot.lane.b32.xlu0 %v132, 3
  %v1029 = vpop.permute.xlu0 %1028
  %1030 = vrot.lane.b32.xlu0 %v140, 3
  %v1031 = vpop.permute.xlu0 %1030
  %1032 = vrot.lane.b32.xlu0 %v139, 3
  %v1033 = vpop.permute.xlu0 %1032
  %1034 = vrot.lane.b32.xlu0 %v141, 3
  %v1035 = vpop.permute.xlu0 %1034
  %1036 = vrot.lane.b32.xlu0 %v149, 3
  %v1037 = vpop.permute.xlu0 %1036
  %1038 = vrot.lane.b32.xlu0 %v157, 3
  %v1039 = vpop.permute.xlu0 %1038
  %1040 = vrot.lane.b32.xlu0 %v156, 3
  %v1041 = vpop.permute.xlu0 %1040
  %1042 = vrot.lane.b32.xlu0 %v158, 3
  %v1043 = vpop.permute.xlu0 %1042
  %1044 = vrot.lane.b32.xlu0 %v166, 3
  %v1045 = vpop.permute.xlu0 %1044
  %1046 = vrot.lane.b32.xlu0 %v174, 3
  %v1047 = vpop.permute.xlu0 %1046
  %1048 = vrot.lane.b32.xlu0 %v173, 3
  %v1049 = vpop.permute.xlu0 %1048
  %vm1050 = vcmp.lt.s32.totalorder %v244, 3
  %v1051 = vsel %vm1050, %v1047, %v1049
  %v1052 = vsel %vm1050, %v1045, %v1047
  %v1053 = vsel %vm1050, %v1043, %v1045
  %v1054 = vsel %vm1050, %v1041, %v1043
  %v1055 = vsel %vm1050, %v1039, %v1041
  %v1056 = vsel %vm1050, %v1037, %v1039
  %v1057 = vsel %vm1050, %v1035, %v1037
  %v1058 = vsel %vm1050, %v1033, %v1035
  %v1059 = vsel %vm1050, %v1031, %v1033
  %v1060 = vsel %vm1050, %v1029, %v1031
  %v1061 = vsel %vm1050, %v1027, %v1029
  %v1062 = vsel %vm1050, %v1025, %v1027
  %v1063 = vsel %vm1050, %v1023, %v1025
  %v1064 = vsel %vm1050, %v1021, %v1023
  %v1065 = vsel %vm1050, %v1049, %v1021
  %v1068 = vlaneseq
  %v1069 = vshrl.u32 %v1068, 7
  %v1070 = vsub.s32 0, %v1069
  %v1071 = vrot.slane %v1015, %v1070
  %v1072 = vlaneseq
  %v1073 = vshrl.u32 %v1072, 7
  %v1074 = vsub.s32 1, %v1073
  %v1075 = vrot.slane %v1015, %v1074
  %v1076 = vlaneseq
  %v1077 = vshrl.u32 %v1076, 7
  %v1078 = vsub.s32 2, %v1077
  %v1079 = vrot.slane %v1015, %v1078
  %v1080 = vlaneseq
  %v1081 = vshrl.u32 %v1080, 7
  %v1082 = vsub.s32 3, %v1081
  %v1083 = vrot.slane %v1015, %v1082
  %v1084 = vlaneseq
  %v1085 = vshrl.u32 %v1084, 7
  %v1086 = vsub.s32 4, %v1085
  %v1087 = vrot.slane %v1015, %v1086
  %v1088 = vlaneseq
  %v1089 = vshrl.u32 %v1088, 7
  %v1090 = vsub.s32 5, %v1089
  %v1091 = vrot.slane %v1015, %v1090
  %v1092 = vlaneseq
  %v1093 = vshrl.u32 %v1092, 7
  %v1094 = vsub.s32 6, %v1093
  %v1095 = vrot.slane %v1015, %v1094
  %v1096 = vlaneseq
  %v1097 = vshrl.u32 %v1096, 7
  %v1098 = vsub.s32 7, %v1097
  %v1099 = vrot.slane %v1015, %v1098
  %v1100 = vlaneseq
  %v1101 = vshrl.u32 %v1100, 7
  %v1102 = vsub.s32 0, %v1101
  %v1103 = vrot.slane %v1019, %v1102
  %v1104 = vlaneseq
  %v1105 = vshrl.u32 %v1104, 7
  %v1106 = vsub.s32 1, %v1105
  %v1107 = vrot.slane %v1019, %v1106
  %v1108 = vlaneseq
  %v1109 = vshrl.u32 %v1108, 7
  %v1110 = vsub.s32 2, %v1109
  %v1111 = vrot.slane %v1019, %v1110
  %v1112 = vlaneseq
  %v1113 = vshrl.u32 %v1112, 7
  %v1114 = vsub.s32 3, %v1113
  %v1115 = vrot.slane %v1019, %v1114
  %v1116 = vlaneseq
  %v1117 = vshrl.u32 %v1116, 7
  %v1118 = vsub.s32 4, %v1117
  %v1119 = vrot.slane %v1019, %v1118
  %v1120 = vlaneseq
  %v1121 = vshrl.u32 %v1120, 7
  %v1122 = vsub.s32 5, %v1121
  %v1123 = vrot.slane %v1019, %v1122
  %v1124 = vlaneseq
  %v1125 = vshrl.u32 %v1124, 7
  %v1126 = vsub.s32 6, %v1125
  %v1127 = vrot.slane %v1019, %v1126
  %v1143 = vmul.f32 %v1071, %v1065
  %v1144 = vmul.f32 %v1075, %v1064
  %v1145 = vmul.f32 %v1079, %v1063
  %v1146 = vmul.f32 %v1083, %v1062
  %v1147 = vmul.f32 %v1087, %v1061
  %v1148 = vmul.f32 %v1091, %v1060
  %v1149 = vmul.f32 %v1095, %v1059
  %v1150 = vmul.f32 %v1099, %v1058
  %v1151 = vmul.f32 %v1103, %v1057
  %v1152 = vmul.f32 %v1107, %v1056
  %v1153 = vmul.f32 %v1111, %v1055
  %v1154 = vmul.f32 %v1115, %v1054
  %v1155 = vmul.f32 %v1119, %v1053
  %v1156 = vmul.f32 %v1123, %v1052
  %v1157 = vmul.f32 %v1127, %v1051
  %v1158 = vadd.f32 %v997, %v1143
  %v1159 = vadd.f32 %v998, %v1144
  %v1160 = vadd.f32 %v999, %v1145
  %v1161 = vadd.f32 %v1000, %v1146
  %v1162 = vadd.f32 %v1001, %v1147
  %v1163 = vadd.f32 %v1002, %v1148
  %v1164 = vadd.f32 %v1003, %v1149
  %v1165 = vadd.f32 %v1004, %v1150
  %v1166 = vadd.f32 %v1005, %v1151
  %v1167 = vadd.f32 %v1006, %v1152
  %v1168 = vadd.f32 %v1007, %v1153
  %v1169 = vadd.f32 %v1008, %v1154
  %v1170 = vadd.f32 %v1009, %v1155
  %v1171 = vadd.f32 %v1010, %v1156
  %v1172 = vadd.f32 %v1011, %v1157
  %s1173 = scalar_lea.vmem %s0, 120
  %v1174 = vld [vmem:[%s1173] ss:$8 sm:$0xf]
  %v1175 = vld [vmem:[%s1173] ss:$8 sm:$0xf0]
  %v1176 = vor.u32 %v1174, %v1175
  %s1177 = scalar_lea.vmem %s0, 184
  %v1178 = vld [vmem:[%s1177] ss:$8 sm:$0xf]
  %v1179 = vld [vmem:[%s1177] ss:$8 sm:$0xf0]
  %v1180 = vor.u32 %v1178, %v1179
  %1181 = vrot.lane.b32.xlu0 %v115, 124
  %v1182 = vpop.permute.xlu0 %1181
  %1183 = vrot.lane.b32.xlu0 %v123, 124
  %v1184 = vpop.permute.xlu0 %1183
  %1185 = vrot.lane.b32.xlu0 %v122, 124
  %v1186 = vpop.permute.xlu0 %1185
  %1187 = vrot.lane.b32.xlu0 %v124, 124
  %v1188 = vpop.permute.xlu0 %1187
  %1189 = vrot.lane.b32.xlu0 %v132, 124
  %v1190 = vpop.permute.xlu0 %1189
  %1191 = vrot.lane.b32.xlu0 %v140, 124
  %v1192 = vpop.permute.xlu0 %1191
  %1193 = vrot.lane.b32.xlu0 %v139, 124
  %v1194 = vpop.permute.xlu0 %1193
  %1195 = vrot.lane.b32.xlu0 %v141, 124
  %v1196 = vpop.permute.xlu0 %1195
  %1197 = vrot.lane.b32.xlu0 %v149, 124
  %v1198 = vpop.permute.xlu0 %1197
  %1199 = vrot.lane.b32.xlu0 %v157, 124
  %v1200 = vpop.permute.xlu0 %1199
  %1201 = vrot.lane.b32.xlu0 %v156, 124
  %v1202 = vpop.permute.xlu0 %1201
  %1203 = vrot.lane.b32.xlu0 %v158, 124
  %v1204 = vpop.permute.xlu0 %1203
  %1205 = vrot.lane.b32.xlu0 %v166, 124
  %v1206 = vpop.permute.xlu0 %1205
  %1207 = vrot.lane.b32.xlu0 %v174, 124
  %v1208 = vpop.permute.xlu0 %1207
  %1209 = vrot.lane.b32.xlu0 %v173, 124
  %v1210 = vpop.permute.xlu0 %1209
  %vm1211 = vcmp.lt.s32.totalorder %v244, 124
  %v1212 = vsel %vm1211, %v1208, %v1210
  %v1213 = vsel %vm1211, %v1206, %v1208
  %v1214 = vsel %vm1211, %v1204, %v1206
  %v1215 = vsel %vm1211, %v1202, %v1204
  %v1216 = vsel %vm1211, %v1200, %v1202
  %v1217 = vsel %vm1211, %v1198, %v1200
  %v1218 = vsel %vm1211, %v1196, %v1198
  %v1219 = vsel %vm1211, %v1194, %v1196
  %v1220 = vsel %vm1211, %v1192, %v1194
  %v1221 = vsel %vm1211, %v1190, %v1192
  %v1222 = vsel %vm1211, %v1188, %v1190
  %v1223 = vsel %vm1211, %v1186, %v1188
  %v1224 = vsel %vm1211, %v1184, %v1186
  %v1225 = vsel %vm1211, %v1182, %v1184
  %v1226 = vsel %vm1211, %v1210, %v1182
  %v1229 = vlaneseq
  %v1230 = vshrl.u32 %v1229, 7
  %v1231 = vsub.s32 0, %v1230
  %v1232 = vrot.slane %v1176, %v1231
  %v1233 = vlaneseq
  %v1234 = vshrl.u32 %v1233, 7
  %v1235 = vsub.s32 1, %v1234
  %v1236 = vrot.slane %v1176, %v1235
  %v1237 = vlaneseq
  %v1238 = vshrl.u32 %v1237, 7
  %v1239 = vsub.s32 2, %v1238
  %v1240 = vrot.slane %v1176, %v1239
  %v1241 = vlaneseq
  %v1242 = vshrl.u32 %v1241, 7
  %v1243 = vsub.s32 3, %v1242
  %v1244 = vrot.slane %v1176, %v1243
  %v1245 = vlaneseq
  %v1246 = vshrl.u32 %v1245, 7
  %v1247 = vsub.s32 4, %v1246
  %v1248 = vrot.slane %v1176, %v1247
  %v1249 = vlaneseq
  %v1250 = vshrl.u32 %v1249, 7
  %v1251 = vsub.s32 5, %v1250
  %v1252 = vrot.slane %v1176, %v1251
  %v1253 = vlaneseq
  %v1254 = vshrl.u32 %v1253, 7
  %v1255 = vsub.s32 6, %v1254
  %v1256 = vrot.slane %v1176, %v1255
  %v1257 = vlaneseq
  %v1258 = vshrl.u32 %v1257, 7
  %v1259 = vsub.s32 7, %v1258
  %v1260 = vrot.slane %v1176, %v1259
  %v1261 = vlaneseq
  %v1262 = vshrl.u32 %v1261, 7
  %v1263 = vsub.s32 0, %v1262
  %v1264 = vrot.slane %v1180, %v1263
  %v1265 = vlaneseq
  %v1266 = vshrl.u32 %v1265, 7
  %v1267 = vsub.s32 1, %v1266
  %v1268 = vrot.slane %v1180, %v1267
  %v1269 = vlaneseq
  %v1270 = vshrl.u32 %v1269, 7
  %v1271 = vsub.s32 2, %v1270
  %v1272 = vrot.slane %v1180, %v1271
  %v1273 = vlaneseq
  %v1274 = vshrl.u32 %v1273, 7
  %v1275 = vsub.s32 3, %v1274
  %v1276 = vrot.slane %v1180, %v1275
  %v1277 = vlaneseq
  %v1278 = vshrl.u32 %v1277, 7
  %v1279 = vsub.s32 4, %v1278
  %v1280 = vrot.slane %v1180, %v1279
  %v1281 = vlaneseq
  %v1282 = vshrl.u32 %v1281, 7
  %v1283 = vsub.s32 5, %v1282
  %v1284 = vrot.slane %v1180, %v1283
  %v1285 = vlaneseq
  %v1286 = vshrl.u32 %v1285, 7
  %v1287 = vsub.s32 6, %v1286
  %v1288 = vrot.slane %v1180, %v1287
  %v1304 = vmul.f32 %v1232, %v1225
  %v1305 = vmul.f32 %v1236, %v1224
  %v1306 = vmul.f32 %v1240, %v1223
  %v1307 = vmul.f32 %v1244, %v1222
  %v1308 = vmul.f32 %v1248, %v1221
  %v1309 = vmul.f32 %v1252, %v1220
  %v1310 = vmul.f32 %v1256, %v1219
  %v1311 = vmul.f32 %v1260, %v1218
  %v1312 = vmul.f32 %v1264, %v1217
  %v1313 = vmul.f32 %v1268, %v1216
  %v1314 = vmul.f32 %v1272, %v1215
  %v1315 = vmul.f32 %v1276, %v1214
  %v1316 = vmul.f32 %v1280, %v1213
  %v1317 = vmul.f32 %v1284, %v1212
  %v1318 = vmul.f32 %v1288, %v1226
  %v1319 = vadd.f32 %v1158, %v1304
  %v1320 = vadd.f32 %v1159, %v1305
  %v1321 = vadd.f32 %v1160, %v1306
  %v1322 = vadd.f32 %v1161, %v1307
  %v1323 = vadd.f32 %v1162, %v1308
  %v1324 = vadd.f32 %v1163, %v1309
  %v1325 = vadd.f32 %v1164, %v1310
  %v1326 = vadd.f32 %v1165, %v1311
  %v1327 = vadd.f32 %v1166, %v1312
  %v1328 = vadd.f32 %v1167, %v1313
  %v1329 = vadd.f32 %v1168, %v1314
  %v1330 = vadd.f32 %v1169, %v1315
  %v1331 = vadd.f32 %v1170, %v1316
  %v1332 = vadd.f32 %v1171, %v1317
  %v1333 = vadd.f32 %v1172, %v1318
  %v1334 = vld [vmem:[%s0] ss:$8 sm:$0xf]
  %v1335 = vld [vmem:[%s0] ss:$8 sm:$0xf0]
  %v1336 = vor.u32 %v1334, %v1335
  %s1337 = scalar_lea.vmem %s0, 64
  %v1338 = vld [vmem:[%s1337] ss:$8 sm:$0xf]
  %v1339 = vld [vmem:[%s1337] ss:$8 sm:$0xf0]
  %v1340 = vor.u32 %v1338, %v1339
  %1341 = vrot.lane.b32.xlu0 %v115, 4
  %v1342 = vpop.permute.xlu0 %1341
  %1343 = vrot.lane.b32.xlu0 %v123, 4
  %v1344 = vpop.permute.xlu0 %1343
  %1345 = vrot.lane.b32.xlu0 %v122, 4
  %v1346 = vpop.permute.xlu0 %1345
  %1347 = vrot.lane.b32.xlu0 %v124, 4
  %v1348 = vpop.permute.xlu0 %1347
  %1349 = vrot.lane.b32.xlu0 %v132, 4
  %v1350 = vpop.permute.xlu0 %1349
  %1351 = vrot.lane.b32.xlu0 %v140, 4
  %v1352 = vpop.permute.xlu0 %1351
  %1353 = vrot.lane.b32.xlu0 %v139, 4
  %v1354 = vpop.permute.xlu0 %1353
  %1355 = vrot.lane.b32.xlu0 %v141, 4
  %v1356 = vpop.permute.xlu0 %1355
  %1357 = vrot.lane.b32.xlu0 %v149, 4
  %v1358 = vpop.permute.xlu0 %1357
  %1359 = vrot.lane.b32.xlu0 %v157, 4
  %v1360 = vpop.permute.xlu0 %1359
  %1361 = vrot.lane.b32.xlu0 %v156, 4
  %v1362 = vpop.permute.xlu0 %1361
  %1363 = vrot.lane.b32.xlu0 %v158, 4
  %v1364 = vpop.permute.xlu0 %1363
  %1365 = vrot.lane.b32.xlu0 %v166, 4
  %v1366 = vpop.permute.xlu0 %1365
  %1367 = vrot.lane.b32.xlu0 %v174, 4
  %v1368 = vpop.permute.xlu0 %1367
  %1369 = vrot.lane.b32.xlu0 %v173, 4
  %v1370 = vpop.permute.xlu0 %1369
  %vm1371 = vcmp.lt.s32.totalorder %v244, 4
  %v1372 = vsel %vm1371, %v1368, %v1370
  %v1373 = vsel %vm1371, %v1366, %v1368
  %v1374 = vsel %vm1371, %v1364, %v1366
  %v1375 = vsel %vm1371, %v1362, %v1364
  %v1376 = vsel %vm1371, %v1360, %v1362
  %v1377 = vsel %vm1371, %v1358, %v1360
  %v1378 = vsel %vm1371, %v1356, %v1358
  %v1379 = vsel %vm1371, %v1354, %v1356
  %v1380 = vsel %vm1371, %v1352, %v1354
  %v1381 = vsel %vm1371, %v1350, %v1352
  %v1382 = vsel %vm1371, %v1348, %v1350
  %v1383 = vsel %vm1371, %v1346, %v1348
  %v1384 = vsel %vm1371, %v1344, %v1346
  %v1385 = vsel %vm1371, %v1342, %v1344
  %v1386 = vsel %vm1371, %v1370, %v1342
  %v1389 = vlaneseq
  %v1390 = vshrl.u32 %v1389, 7
  %v1391 = vsub.s32 0, %v1390
  %v1392 = vrot.slane %v1336, %v1391
  %v1393 = vlaneseq
  %v1394 = vshrl.u32 %v1393, 7
  %v1395 = vsub.s32 1, %v1394
  %v1396 = vrot.slane %v1336, %v1395
  %v1397 = vlaneseq
  %v1398 = vshrl.u32 %v1397, 7
  %v1399 = vsub.s32 2, %v1398
  %v1400 = vrot.slane %v1336, %v1399
  %v1401 = vlaneseq
  %v1402 = vshrl.u32 %v1401, 7
  %v1403 = vsub.s32 3, %v1402
  %v1404 = vrot.slane %v1336, %v1403
  %v1405 = vlaneseq
  %v1406 = vshrl.u32 %v1405, 7
  %v1407 = vsub.s32 4, %v1406
  %v1408 = vrot.slane %v1336, %v1407
  %v1409 = vlaneseq
  %v1410 = vshrl.u32 %v1409, 7
  %v1411 = vsub.s32 5, %v1410
  %v1412 = vrot.slane %v1336, %v1411
  %v1413 = vlaneseq
  %v1414 = vshrl.u32 %v1413, 7
  %v1415 = vsub.s32 6, %v1414
  %v1416 = vrot.slane %v1336, %v1415
  %v1417 = vlaneseq
  %v1418 = vshrl.u32 %v1417, 7
  %v1419 = vsub.s32 7, %v1418
  %v1420 = vrot.slane %v1336, %v1419
  %v1421 = vlaneseq
  %v1422 = vshrl.u32 %v1421, 7
  %v1423 = vsub.s32 0, %v1422
  %v1424 = vrot.slane %v1340, %v1423
  %v1425 = vlaneseq
  %v1426 = vshrl.u32 %v1425, 7
  %v1427 = vsub.s32 1, %v1426
  %v1428 = vrot.slane %v1340, %v1427
  %v1429 = vlaneseq
  %v1430 = vshrl.u32 %v1429, 7
  %v1431 = vsub.s32 2, %v1430
  %v1432 = vrot.slane %v1340, %v1431
  %v1433 = vlaneseq
  %v1434 = vshrl.u32 %v1433, 7
  %v1435 = vsub.s32 3, %v1434
  %v1436 = vrot.slane %v1340, %v1435
  %v1437 = vlaneseq
  %v1438 = vshrl.u32 %v1437, 7
  %v1439 = vsub.s32 4, %v1438
  %v1440 = vrot.slane %v1340, %v1439
  %v1441 = vlaneseq
  %v1442 = vshrl.u32 %v1441, 7
  %v1443 = vsub.s32 5, %v1442
  %v1444 = vrot.slane %v1340, %v1443
  %v1445 = vlaneseq
  %v1446 = vshrl.u32 %v1445, 7
  %v1447 = vsub.s32 6, %v1446
  %v1448 = vrot.slane %v1340, %v1447
  %v1464 = vmul.f32 %v1392, %v1386
  %v1465 = vmul.f32 %v1396, %v1385
  %v1466 = vmul.f32 %v1400, %v1384
  %v1467 = vmul.f32 %v1404, %v1383
  %v1468 = vmul.f32 %v1408, %v1382
  %v1469 = vmul.f32 %v1412, %v1381
  %v1470 = vmul.f32 %v1416, %v1380
  %v1471 = vmul.f32 %v1420, %v1379
  %v1472 = vmul.f32 %v1424, %v1378
  %v1473 = vmul.f32 %v1428, %v1377
  %v1474 = vmul.f32 %v1432, %v1376
  %v1475 = vmul.f32 %v1436, %v1375
  %v1476 = vmul.f32 %v1440, %v1374
  %v1477 = vmul.f32 %v1444, %v1373
  %v1478 = vmul.f32 %v1448, %v1372
  %v1479 = vadd.f32 %v1319, %v1464
  %v1480 = vadd.f32 %v1320, %v1465
  %v1481 = vadd.f32 %v1321, %v1466
  %v1482 = vadd.f32 %v1322, %v1467
  %v1483 = vadd.f32 %v1323, %v1468
  %v1484 = vadd.f32 %v1324, %v1469
  %v1485 = vadd.f32 %v1325, %v1470
  %v1486 = vadd.f32 %v1326, %v1471
  %v1487 = vadd.f32 %v1327, %v1472
  %v1488 = vadd.f32 %v1328, %v1473
  %v1489 = vadd.f32 %v1329, %v1474
  %v1490 = vadd.f32 %v1330, %v1475
  %v1491 = vadd.f32 %v1331, %v1476
  %v1492 = vadd.f32 %v1332, %v1477
  %v1493 = vadd.f32 %v1333, %v1478
  %s1494 = scalar_lea.vmem %s0, 121
  %v1495 = vld [vmem:[%s1494] ss:$8 sm:$0xf]
  %v1496 = vld [vmem:[%s1494] ss:$8 sm:$0xf0]
  %v1497 = vor.u32 %v1495, %v1496
  %s1498 = scalar_lea.vmem %s0, 185
  %v1499 = vld [vmem:[%s1498] ss:$8 sm:$0xf]
  %v1500 = vld [vmem:[%s1498] ss:$8 sm:$0xf0]
  %v1501 = vor.u32 %v1499, %v1500
  %vm1502 = vcmp.gt.f32.partialorder %v1497, 0.5
  %vm1503 = vcmp.gt.f32.partialorder %v1501, 0.5
  %s1504 = scalar_lea.vmem %s0, 122
  %v1505 = vld [vmem:[%s1504] ss:$8 sm:$0xf]
  %v1506 = vld [vmem:[%s1504] ss:$8 sm:$0xf0]
  %v1507 = vor.u32 %v1505, %v1506
  %s1508 = scalar_lea.vmem %s0, 186
  %v1509 = vld [vmem:[%s1508] ss:$8 sm:$0xf]
  %v1510 = vld [vmem:[%s1508] ss:$8 sm:$0xf0]
  %v1511 = vor.u32 %v1509, %v1510
  %v1512 = vsel %vm1502, 1, 0
  %v1513 = vsel %vm1503, 1, 0
  %v1514 = vlaneseq
  %v1515 = vshrl.u32 %v1514, 7
  %v1516 = vsub.s32 0, %v1515
  %v1517 = vrot.slane %v1512, %v1516
  %v1518 = vlaneseq
  %v1519 = vshrl.u32 %v1518, 7
  %v1520 = vsub.s32 1, %v1519
  %v1521 = vrot.slane %v1512, %v1520
  %v1522 = vlaneseq
  %v1523 = vshrl.u32 %v1522, 7
  %v1524 = vsub.s32 2, %v1523
  %v1525 = vrot.slane %v1512, %v1524
  %v1526 = vlaneseq
  %v1527 = vshrl.u32 %v1526, 7
  %v1528 = vsub.s32 3, %v1527
  %v1529 = vrot.slane %v1512, %v1528
  %v1530 = vlaneseq
  %v1531 = vshrl.u32 %v1530, 7
  %v1532 = vsub.s32 4, %v1531
  %v1533 = vrot.slane %v1512, %v1532
  %v1534 = vlaneseq
  %v1535 = vshrl.u32 %v1534, 7
  %v1536 = vsub.s32 5, %v1535
  %v1537 = vrot.slane %v1512, %v1536
  %v1538 = vlaneseq
  %v1539 = vshrl.u32 %v1538, 7
  %v1540 = vsub.s32 6, %v1539
  %v1541 = vrot.slane %v1512, %v1540
  %v1542 = vlaneseq
  %v1543 = vshrl.u32 %v1542, 7
  %v1544 = vsub.s32 7, %v1543
  %v1545 = vrot.slane %v1512, %v1544
  %v1546 = vlaneseq
  %v1547 = vshrl.u32 %v1546, 7
  %v1548 = vsub.s32 0, %v1547
  %v1549 = vrot.slane %v1513, %v1548
  %v1550 = vlaneseq
  %v1551 = vshrl.u32 %v1550, 7
  %v1552 = vsub.s32 1, %v1551
  %v1553 = vrot.slane %v1513, %v1552
  %v1554 = vlaneseq
  %v1555 = vshrl.u32 %v1554, 7
  %v1556 = vsub.s32 2, %v1555
  %v1557 = vrot.slane %v1513, %v1556
  %v1558 = vlaneseq
  %v1559 = vshrl.u32 %v1558, 7
  %v1560 = vsub.s32 3, %v1559
  %v1561 = vrot.slane %v1513, %v1560
  %v1562 = vlaneseq
  %v1563 = vshrl.u32 %v1562, 7
  %v1564 = vsub.s32 4, %v1563
  %v1565 = vrot.slane %v1513, %v1564
  %v1566 = vlaneseq
  %v1567 = vshrl.u32 %v1566, 7
  %v1568 = vsub.s32 5, %v1567
  %v1569 = vrot.slane %v1513, %v1568
  %v1570 = vlaneseq
  %v1571 = vshrl.u32 %v1570, 7
  %v1572 = vsub.s32 6, %v1571
  %v1573 = vrot.slane %v1513, %v1572
  %vm1574 = vcmp.eq.s32.totalorder %v1517, 1
  %vm1575 = vcmp.eq.s32.totalorder %v1521, 1
  %vm1576 = vcmp.eq.s32.totalorder %v1525, 1
  %vm1577 = vcmp.eq.s32.totalorder %v1529, 1
  %vm1578 = vcmp.eq.s32.totalorder %v1533, 1
  %vm1579 = vcmp.eq.s32.totalorder %v1537, 1
  %vm1580 = vcmp.eq.s32.totalorder %v1541, 1
  %vm1581 = vcmp.eq.s32.totalorder %v1545, 1
  %vm1582 = vcmp.eq.s32.totalorder %v1549, 1
  %vm1583 = vcmp.eq.s32.totalorder %v1553, 1
  %vm1584 = vcmp.eq.s32.totalorder %v1557, 1
  %vm1585 = vcmp.eq.s32.totalorder %v1561, 1
  %vm1586 = vcmp.eq.s32.totalorder %v1565, 1
  %vm1587 = vcmp.eq.s32.totalorder %v1569, 1
  %vm1588 = vcmp.eq.s32.totalorder %v1573, 1
  %v1593 = vcombine.high %v11, %v11
  %v1595 = vunpack.c.l.s4 1983009808
  %v1596 = vunpack.c.0.s8 %v1595
  %v1597 = vlaneseq
  %v1598 = vshrl.u32 %v1597, 7
  %v1599 = vsub.s32 %v1596, %v1598
  %v1600 = vrot.slane %v11, %v1599
  %v1602 = vunpack.c.l.s4 1983009808
  %v1603 = vunpack.c.0.s8 %v1602
  %v1604 = vlaneseq
  %v1605 = vshrl.u32 %v1604, 7
  %v1606 = vsub.s32 %v1603, %v1605
  %v1607 = vrot.slane %v1593, %v1606
  %v1608 = vcombine.high %v1600, %v1600
  %v1609 = vcombine.high %v1607, %v1607
  %v1610 = vcombine.high %v12, %v12
  %v1612 = vunpack.c.l.s4 1983009808
  %v1613 = vunpack.c.0.s8 %v1612
  %v1614 = vlaneseq
  %v1615 = vshrl.u32 %v1614, 7
  %v1616 = vsub.s32 %v1613, %v1615
  %v1617 = vrot.slane %v12, %v1616
  %v1619 = vunpack.c.l.s4 1983009808
  %v1620 = vunpack.c.0.s8 %v1619
  %v1621 = vlaneseq
  %v1622 = vshrl.u32 %v1621, 7
  %v1623 = vsub.s32 %v1620, %v1622
  %v1624 = vrot.slane %v1610, %v1623
  %v1625 = vcombine.high %v1617, %v1617
  %v1626 = vcombine.high %v1624, %v1624
  %v1627 = vcombine.high %v13, %v13
  %v1629 = vunpack.c.l.s4 1983009808
  %v1630 = vunpack.c.0.s8 %v1629
  %v1631 = vlaneseq
  %v1632 = vshrl.u32 %v1631, 7
  %v1633 = vsub.s32 %v1630, %v1632
  %v1634 = vrot.slane %v13, %v1633
  %v1636 = vunpack.c.l.s4 1983009808
  %v1637 = vunpack.c.0.s8 %v1636
  %v1638 = vlaneseq
  %v1639 = vshrl.u32 %v1638, 7
  %v1640 = vsub.s32 %v1637, %v1639
  %v1641 = vrot.slane %v1627, %v1640
  %v1642 = vcombine.high %v1634, %v1634
  %v1643 = vcombine.high %v1641, %v1641
  %v1644 = vcombine.high %v14, %v14
  %v1646 = vunpack.c.l.s4 1983009808
  %v1647 = vunpack.c.0.s8 %v1646
  %v1648 = vlaneseq
  %v1649 = vshrl.u32 %v1648, 7
  %v1650 = vsub.s32 %v1647, %v1649
  %v1651 = vrot.slane %v14, %v1650
  %v1653 = vunpack.c.l.s4 1983009808
  %v1654 = vunpack.c.0.s8 %v1653
  %v1655 = vlaneseq
  %v1656 = vshrl.u32 %v1655, 7
  %v1657 = vsub.s32 %v1654, %v1656
  %v1658 = vrot.slane %v1644, %v1657
  %v1659 = vcombine.high %v1651, %v1651
  %v1675 = vsel %vm1574, %v1600, %v1479
  %v1676 = vsel %vm1575, %v1608, %v1480
  %v1677 = vsel %vm1576, %v1607, %v1481
  %v1678 = vsel %vm1577, %v1609, %v1482
  %v1679 = vsel %vm1578, %v1617, %v1483
  %v1680 = vsel %vm1579, %v1625, %v1484
  %v1681 = vsel %vm1580, %v1624, %v1485
  %v1682 = vsel %vm1581, %v1626, %v1486
  %v1683 = vsel %vm1582, %v1634, %v1487
  %v1684 = vsel %vm1583, %v1642, %v1488
  %v1685 = vsel %vm1584, %v1641, %v1489
  %v1686 = vsel %vm1585, %v1643, %v1490
  %v1687 = vsel %vm1586, %v1651, %v1491
  %v1688 = vsel %vm1587, %v1659, %v1492
  %v1689 = vsel %vm1588, %v1658, %v1493
  %v1690 = vxor.u32 %v1675, 2147483648
  %v1691 = vxor.u32 %v1676, 2147483648
  %v1692 = vxor.u32 %v1677, 2147483648
  %v1693 = vxor.u32 %v1678, 2147483648
  %v1694 = vxor.u32 %v1679, 2147483648
  %v1695 = vxor.u32 %v1680, 2147483648
  %v1696 = vxor.u32 %v1681, 2147483648
  %v1697 = vxor.u32 %v1682, 2147483648
  %v1698 = vxor.u32 %v1683, 2147483648
  %v1699 = vxor.u32 %v1684, 2147483648
  %v1700 = vxor.u32 %v1685, 2147483648
  %v1701 = vxor.u32 %v1686, 2147483648
  %v1702 = vxor.u32 %v1687, 2147483648
  %v1703 = vxor.u32 %v1688, 2147483648
  %v1704 = vxor.u32 %v1689, 2147483648
  %v1705 = vmul.f32 %v1690, 1.442695
  %v1706 = vpow.pop %v1705
  %v1707 = vmul.f32 %v1691, 1.442695
  %v1708 = vpow.pop %v1707
  %v1709 = vmul.f32 %v1692, 1.442695
  %v1710 = vpow.pop %v1709
  %v1711 = vmul.f32 %v1693, 1.442695
  %v1712 = vpow.pop %v1711
  %v1713 = vmul.f32 %v1694, 1.442695
  %v1714 = vpow.pop %v1713
  %v1715 = vmul.f32 %v1695, 1.442695
  %v1716 = vpow.pop %v1715
  %v1717 = vmul.f32 %v1696, 1.442695
  %v1718 = vpow.pop %v1717
  %v1719 = vmul.f32 %v1697, 1.442695
  %v1720 = vpow.pop %v1719
  %v1721 = vmul.f32 %v1698, 1.442695
  %v1722 = vpow.pop %v1721
  %v1723 = vmul.f32 %v1699, 1.442695
  %v1724 = vpow.pop %v1723
  %v1725 = vmul.f32 %v1700, 1.442695
  %v1726 = vpow.pop %v1725
  %v1727 = vmul.f32 %v1701, 1.442695
  %v1728 = vpow.pop %v1727
  %v1729 = vmul.f32 %v1702, 1.442695
  %v1730 = vpow.pop %v1729
  %v1731 = vmul.f32 %v1703, 1.442695
  %v1732 = vpow.pop %v1731
  %v1733 = vmul.f32 %v1704, 1.442695
  %v1734 = vpow.pop %v1733
  %v1735 = vadd.f32 %v1706, 1.0
  %v1736 = vadd.f32 %v1708, 1.0
  %v1737 = vadd.f32 %v1710, 1.0
  %v1738 = vadd.f32 %v1712, 1.0
  %v1739 = vadd.f32 %v1714, 1.0
  %v1740 = vadd.f32 %v1716, 1.0
  %v1741 = vadd.f32 %v1718, 1.0
  %v1742 = vadd.f32 %v1720, 1.0
  %v1743 = vadd.f32 %v1722, 1.0
  %v1744 = vadd.f32 %v1724, 1.0
  %v1745 = vadd.f32 %v1726, 1.0
  %v1746 = vadd.f32 %v1728, 1.0
  %v1747 = vadd.f32 %v1730, 1.0
  %v1748 = vadd.f32 %v1732, 1.0
  %v1749 = vadd.f32 %v1734, 1.0
  %v1750 = vrcp.pop %v1735
  %v1751 = vmul.f32 1.0, %v1750
  %v1752 = vrcp.pop %v1736
  %v1753 = vmul.f32 1.0, %v1752
  %v1754 = vrcp.pop %v1737
  %v1755 = vmul.f32 1.0, %v1754
  %v1756 = vrcp.pop %v1738
  %v1757 = vmul.f32 1.0, %v1756
  %v1758 = vrcp.pop %v1739
  %v1759 = vmul.f32 1.0, %v1758
  %v1760 = vrcp.pop %v1740
  %v1761 = vmul.f32 1.0, %v1760
  %v1762 = vrcp.pop %v1741
  %v1763 = vmul.f32 1.0, %v1762
  %v1764 = vrcp.pop %v1742
  %v1765 = vmul.f32 1.0, %v1764
  %v1766 = vrcp.pop %v1743
  %v1767 = vmul.f32 1.0, %v1766
  %v1768 = vrcp.pop %v1744
  %v1769 = vmul.f32 1.0, %v1768
  %v1770 = vrcp.pop %v1745
  %v1771 = vmul.f32 1.0, %v1770
  %v1772 = vrcp.pop %v1746
  %v1773 = vmul.f32 1.0, %v1772
  %v1774 = vrcp.pop %v1747
  %v1775 = vmul.f32 1.0, %v1774
  %v1776 = vrcp.pop %v1748
  %v1777 = vmul.f32 1.0, %v1776
  %v1778 = vrcp.pop %v1749
  %v1779 = vmul.f32 1.0, %v1778
  %v1782 = vlaneseq
  %v1783 = vshrl.u32 %v1782, 7
  %v1784 = vsub.s32 0, %v1783
  %v1785 = vrot.slane %v1507, %v1784
  %v1786 = vlaneseq
  %v1787 = vshrl.u32 %v1786, 7
  %v1788 = vsub.s32 1, %v1787
  %v1789 = vrot.slane %v1507, %v1788
  %v1790 = vlaneseq
  %v1791 = vshrl.u32 %v1790, 7
  %v1792 = vsub.s32 2, %v1791
  %v1793 = vrot.slane %v1507, %v1792
  %v1794 = vlaneseq
  %v1795 = vshrl.u32 %v1794, 7
  %v1796 = vsub.s32 3, %v1795
  %v1797 = vrot.slane %v1507, %v1796
  %v1798 = vlaneseq
  %v1799 = vshrl.u32 %v1798, 7
  %v1800 = vsub.s32 4, %v1799
  %v1801 = vrot.slane %v1507, %v1800
  %v1802 = vlaneseq
  %v1803 = vshrl.u32 %v1802, 7
  %v1804 = vsub.s32 5, %v1803
  %v1805 = vrot.slane %v1507, %v1804
  %v1806 = vlaneseq
  %v1807 = vshrl.u32 %v1806, 7
  %v1808 = vsub.s32 6, %v1807
  %v1809 = vrot.slane %v1507, %v1808
  %v1810 = vlaneseq
  %v1811 = vshrl.u32 %v1810, 7
  %v1812 = vsub.s32 7, %v1811
  %v1813 = vrot.slane %v1507, %v1812
  %v1814 = vlaneseq
  %v1815 = vshrl.u32 %v1814, 7
  %v1816 = vsub.s32 0, %v1815
  %v1817 = vrot.slane %v1511, %v1816
  %v1818 = vlaneseq
  %v1819 = vshrl.u32 %v1818, 7
  %v1820 = vsub.s32 1, %v1819
  %v1821 = vrot.slane %v1511, %v1820
  %v1822 = vlaneseq
  %v1823 = vshrl.u32 %v1822, 7
  %v1824 = vsub.s32 2, %v1823
  %v1825 = vrot.slane %v1511, %v1824
  %v1826 = vlaneseq
  %v1827 = vshrl.u32 %v1826, 7
  %v1828 = vsub.s32 3, %v1827
  %v1829 = vrot.slane %v1511, %v1828
  %v1830 = vlaneseq
  %v1831 = vshrl.u32 %v1830, 7
  %v1832 = vsub.s32 4, %v1831
  %v1833 = vrot.slane %v1511, %v1832
  %v1834 = vlaneseq
  %v1835 = vshrl.u32 %v1834, 7
  %v1836 = vsub.s32 5, %v1835
  %v1837 = vrot.slane %v1511, %v1836
  %v1838 = vlaneseq
  %v1839 = vshrl.u32 %v1838, 7
  %v1840 = vsub.s32 6, %v1839
  %v1841 = vrot.slane %v1511, %v1840
  %v1857 = vmul.f32 %v1785, %v1751
  %v1858 = vmul.f32 %v1789, %v1753
  %v1859 = vmul.f32 %v1793, %v1755
  %v1860 = vmul.f32 %v1797, %v1757
  %v1861 = vmul.f32 %v1801, %v1759
  %v1862 = vmul.f32 %v1805, %v1761
  %v1863 = vmul.f32 %v1809, %v1763
  %v1864 = vmul.f32 %v1813, %v1765
  %v1865 = vmul.f32 %v1817, %v1767
  %v1866 = vmul.f32 %v1821, %v1769
  %v1867 = vmul.f32 %v1825, %v1771
  %v1868 = vmul.f32 %v1829, %v1773
  %v1869 = vmul.f32 %v1833, %v1775
  %v1870 = vmul.f32 %v1837, %v1777
  %v1871 = vmul.f32 %v1841, %v1779
  %v1887 = vcombine.low %v1857, %v1858
  %v1888 = vcombine.low %v1859, %v1860
  %v1890 = vunpack.c.l.s4 1983009808
  %v1891 = vunpack.c.0.s8 %v1890
  %v1892 = vlaneseq
  %v1893 = vshrl.u32 %v1892, 7
  %v1894 = vsub.s32 %v1891, %v1893
  %v1895 = vrot.slane %v1887, %v1894
  %v1897 = vunpack.c.l.s4 1983009808
  %v1898 = vunpack.c.0.s8 %v1897
  %v1899 = vlaneseq
  %v1900 = vshrl.u32 %v1899, 7
  %v1901 = vsub.s32 %v1898, %v1900
  %v1902 = vrot.slane %v1888, %v1901
  %v1903 = vcombine.low %v1895, %v1902
  %v1904 = vcombine.low %v1861, %v1862
  %v1905 = vcombine.low %v1863, %v1864
  %v1907 = vunpack.c.l.s4 1983009808
  %v1908 = vunpack.c.0.s8 %v1907
  %v1909 = vlaneseq
  %v1910 = vshrl.u32 %v1909, 7
  %v1911 = vsub.s32 %v1908, %v1910
  %v1912 = vrot.slane %v1904, %v1911
  %v1914 = vunpack.c.l.s4 1983009808
  %v1915 = vunpack.c.0.s8 %v1914
  %v1916 = vlaneseq
  %v1917 = vshrl.u32 %v1916, 7
  %v1918 = vsub.s32 %v1915, %v1917
  %v1919 = vrot.slane %v1905, %v1918
  %v1920 = vcombine.low %v1912, %v1919
  %v1921 = vcombine.low %v1865, %v1866
  %v1922 = vcombine.low %v1867, %v1868
  %v1924 = vunpack.c.l.s4 1983009808
  %v1925 = vunpack.c.0.s8 %v1924
  %v1926 = vlaneseq
  %v1927 = vshrl.u32 %v1926, 7
  %v1928 = vsub.s32 %v1925, %v1927
  %v1929 = vrot.slane %v1921, %v1928
  %v1931 = vunpack.c.l.s4 1983009808
  %v1932 = vunpack.c.0.s8 %v1931
  %v1933 = vlaneseq
  %v1934 = vshrl.u32 %v1933, 7
  %v1935 = vsub.s32 %v1932, %v1934
  %v1936 = vrot.slane %v1922, %v1935
  %v1937 = vcombine.low %v1929, %v1936
  %v1938 = vcombine.low %v1869, %v1870
  %v1940 = vunpack.c.l.s4 1983009808
  %v1941 = vunpack.c.0.s8 %v1940
  %v1942 = vlaneseq
  %v1943 = vshrl.u32 %v1942, 7
  %v1944 = vsub.s32 %v1941, %v1943
  %v1945 = vrot.slane %v1938, %v1944
  %v1947 = vunpack.c.l.s4 1983009808
  %v1948 = vunpack.c.0.s8 %v1947
  %v1949 = vlaneseq
  %v1950 = vshrl.u32 %v1949, 7
  %v1951 = vsub.s32 %v1948, %v1950
  %v1952 = vrot.slane %v1871, %v1951
  %v1953 = vcombine.low %v1945, %v1952
  %v1958 = vmul.f32 %v11, %v1903
  %v1959 = vmul.f32 %v12, %v1920
  %v1960 = vmul.f32 %v13, %v1937
  %v1961 = vmul.f32 %v14, %v1953
  %1962 = vst [vmem:[%s2] sm:$0xff] %v1958
  %1963 = vst [vmem:[%s2 + $0x8] sm:$0xff] %v1959
  %1964 = vst [vmem:[%s2 + $0x10] sm:$0xff] %v1960
  %1965 = vst [vmem:[%s2 + $0x18] sm:$0x3f] %v1961
  // Predicated region
  $region10: #{_self_gate_impl.1} parent=0 // pred_check
    _
  $region11: #{_self_gate_impl.1} parent=0 // pred_check_branch
    %1967 = sbr.rel (0) target = $region13
  $region12: #{_self_gate_impl.1} parent=0 // pred_region
    _
  $region13: #{_self_gate_impl.1} parent=0 // pred_fallthru
    _
  // Predicated region
  $region14: #{_self_gate_impl.1} parent=0 // pred_check
    _
  $region15: #{_self_gate_impl.1} parent=0 // pred_check_branch
    %1969 = sbr.rel (0) target = $region17
  $region16: #{_self_gate_impl.1} parent=0 // pred_region
    _
  $region17: #{_self_gate_impl.1} parent=0 // pred_fallthru
    _

</llo_original>
